<compile_context>
chip_gen: v7x
topology: tpu7x:2x2x1
jax: 0.10.0
libtpu: 0.0.40
codegen_flags: <defaults>
</compile_context>

<pallas_src>
import jax
import jax.numpy as jnp
from jax.experimental import pallas as pl
from jax.experimental.pallas import tpu as pltpu


def _round_up(x, m):
    return (x + m - 1) // m * m


# ----------------------------------------------------------------------------
# Pallas kernel: packed-contraction 5x5x5 conv + folded BN(eval) + ELU
# ----------------------------------------------------------------------------
def _make_kernel(Dt, H, Wp, CP, KP, KH=5):
    HW = H * Wp

    def kernel(x_ref, w_ref, scale_ref, shift_ref, o_ref):
        # x_ref:     (1, Dt, H+KH-1, Wp, KP) bf16  -- lanes pack (kd, kw, cin)
        # w_ref:     (KH, KP, CP)            bf16  -- constant index map, resident
        # scale_ref: (1, CP) f32, shift_ref: (1, CP) f32
        # o_ref:     (1, Dt, H*Wp, CP)       f32
        scale = scale_ref[...]
        shift = shift_ref[...]

        @pl.loop(0, Dt)
        def _(dd):                                    # one output depth plane
            plane = x_ref[0, dd]                      # (H+4, Wp, KP) bf16
            acc = jnp.zeros((HW, CP), jnp.float32)
            for kh in range(KH):                      # static; slice on a non-minor
                patch = plane[kh:kh + H].reshape(HW, KP)   # dim -> no relayout
                acc = acc + jnp.dot(patch, w_ref[kh],
                                    preferred_element_type=jnp.float32)
            # Folded conv-bias + BatchNorm(eval), then ELU (alpha = 1).
            y = acc * scale + shift
            neg = jnp.exp(jnp.minimum(y, 0.0)) - 1.0  # ~expm1; diff < 1e-7 here
            o_ref[0, dd] = jnp.where(y > 0.0, y, neg)

    return kernel


# ----------------------------------------------------------------------------
# Wrapper: NCDHW in / NCDHW out
# ----------------------------------------------------------------------------
def luconv_forward(x_ncdhw, params, eps=1e-5):
    """ELU(BN(Conv3d(x, kernel=5, padding=2))); BN with running stats (eval)."""
    w = params["conv_w"]                           # (Cout, Cin, 5, 5, 5)
    N, C, D, H, W = x_ncdhw.shape
    KD = KH = KW = 5
    # TODO(synk): for nchan >= 6 (25*C > 128) fall back to channel-lane packing.
    assert KD * KW * C <= 128, "packed-contraction path assumes 25 * C <= 128"

    Wp = _round_up(W, 8)                           # tile-exact (H,Wp)->(H*Wp) reshape
    CP = _round_up(C, 128)                         # lane-dense output channels
    KP = _round_up(KD * KW * C, 128)               # packed contraction lanes
    Dt = next(dt for dt in (8, 4, 2, 1) if D % dt == 0)   # depth planes per step

    # --- activations: channels-last, spatial zero-pad, pack (kd, kw, cin) into
    # the lane dim.  Pure layout plumbing; the conv arithmetic stays in-kernel.
    x = jnp.transpose(x_ncdhw, (0, 2, 3, 4, 1))    # (N, D, H, W, C)
    xp = jnp.pad(x, ((0, 0), (2, 2), (2, 2), (2, 2 + Wp - W), (0, 0)))
    taps = [xp[:, kd:kd + D, :, kw:kw + Wp, :]     # (N, D, H+4, Wp, C) each
            for kd in range(KD) for kw in range(KW)]
    x5 = jnp.stack(taps, axis=-2).reshape(N, D, H + 4, Wp, KD * KW * C)
    x5 = jnp.pad(x5, ((0, 0),) * 4 + ((0, KP - KD * KW * C),)).astype(jnp.bfloat16)

    # --- weights: (kh, packed (kd, kw, cin), cout), zero-padded, bf16.
    wt = jnp.transpose(w, (3, 2, 4, 1, 0)).reshape(KH, KD * KW * C, C)
    wt = jnp.pad(wt, ((0, 0), (0, KP - KD * KW * C), (0, CP - C))).astype(jnp.bfloat16)

    # --- fold conv bias + BatchNorm(eval) into per-output-channel scale/shift.
    s = params["bn_gamma"] / jnp.sqrt(params["bn_var"] + eps)
    t = params["bn_beta"] + s * (params["conv_b"] - params["bn_mean"])
    scale = jnp.pad(s, (0, CP - C)).reshape(1, CP).astype(jnp.float32)
    shift = jnp.pad(t, (0, CP - C)).reshape(1, CP).astype(jnp.float32)

    kernel = _make_kernel(Dt, H, Wp, CP, KP, KH)
    out = pl.pallas_call(
        kernel,
        out_shape=jax.ShapeDtypeStruct((N, D, H * Wp, CP), jnp.float32),
        grid_spec=pltpu.PrefetchScalarGridSpec(
            num_scalar_prefetch=0,
            grid=(N, D // Dt),
            in_specs=[
                pl.BlockSpec((1, Dt, H + 4, Wp, KP), lambda n, dc: (n, dc, 0, 0, 0)),
                # full weight tensor, constant index -> DMA'd once, VMEM-resident
                pl.BlockSpec((KH, KP, CP), lambda n, dc: (0, 0, 0)),
                pl.BlockSpec((1, CP), lambda n, dc: (0, 0)),
                pl.BlockSpec((1, CP), lambda n, dc: (0, 0)),
            ],
            out_specs=pl.BlockSpec((1, Dt, H * Wp, CP), lambda n, dc: (n, dc, 0, 0)),
        ),
        compiler_params=pltpu.CompilerParams(
            dimension_semantics=("parallel", "parallel")),
    )(x5, wt, scale, shift)

    out = out.reshape(N, D, H, Wp, CP)[:, :, :, :W, :C]
    return jnp.transpose(out, (0, 4, 1, 2, 3))     # back to NCDHW


# ----------------------------------------------------------------------------
# Parameters (deterministic) and pure-JAX reference
# ----------------------------------------------------------------------------
def init_params(key, nchan):
    ks = jax.random.split(key, 6)
    return {
        "conv_w": 0.05 * jax.random.normal(ks[0], (nchan, nchan, 5, 5, 5), jnp.float32),
        "conv_b": 0.1 * jax.random.normal(ks[1], (nchan,), jnp.float32),
        "bn_gamma": 1.0 + 0.1 * jax.random.normal(ks[2], (nchan,), jnp.float32),
        "bn_beta": 0.1 * jax.random.normal(ks[3], (nchan,), jnp.float32),
        "bn_mean": 0.1 * jax.random.normal(ks[4], (nchan,), jnp.float32),
        "bn_var": 1.0 + 0.2 * jax.random.uniform(ks[5], (nchan,), jnp.float32),
    }


def ref_forward(x, params, eps=1e-5):
    out = jax.lax.conv_general_dilated(
        x, params["conv_w"], (1, 1, 1), [(2, 2)] * 3,
        dimension_numbers=("NCDHW", "OIDHW", "NCDHW"),
        precision=jax.lax.Precision.HIGHEST)
    sh = (1, -1, 1, 1, 1)
    out = out + params["conv_b"].reshape(sh)
    out = ((out - params["bn_mean"].reshape(sh))
           / jnp.sqrt(params["bn_var"] + eps).reshape(sh)
           * params["bn_gamma"].reshape(sh) + params["bn_beta"].reshape(sh))
    return jnp.where(out > 0.0, out, jnp.expm1(out))


if __name__ == "__main__":
    key = jax.random.PRNGKey(0)
    k_x, k_p = jax.random.split(key)

    # LUConv(nchan=4, elu=True); input (N, C, D, H, W)
    N, C, D, H, W = 2, 4, 16, 16, 16
    x = jax.random.normal(k_x, (N, C, D, H, W), jnp.float32)
    params = init_params(k_p, C)

    fwd = jax.jit(luconv_forward)
    out = jax.block_until_ready(fwd(x, params))

    ref = ref_forward(x, params)
    assert out.shape == ref.shape == (N, C, D, H, W), (out.shape, ref.shape)
    max_err = float(jnp.max(jnp.abs(out - ref)))
    if not bool(jnp.allclose(out, ref, atol=3e-2, rtol=3e-2)):
        raise AssertionError(f"Pallas output mismatch vs reference, max abs err = {max_err}")
    print("KERNEL_OK")
</pallas_src>

<mosaic_0001>
module attributes {stable_mosaic.version = 11 : i64} {
  func.func @kernel(%arg0: i32, %arg1: i32, %arg2: memref<1x8x20x16x128xbf16, #tpu.memory_space<vmem>>, %arg3: memref<5x128x128xbf16, #tpu.memory_space<vmem>>, %arg4: memref<1x128xf32, #tpu.memory_space<vmem>>, %arg5: memref<1x128xf32, #tpu.memory_space<vmem>>, %arg6: memref<1x8x256x128xf32, #tpu.memory_space<vmem>>) attributes {dimension_semantics = [#tpu.dimension_semantics<parallel>, #tpu.dimension_semantics<parallel>], iteration_bounds = array<i64: 2, 2>, scalar_prefetch = 0 : i64, scratch_operands = 0 : i64, tpu.core_type = #tpu.core_type<tc>, window_params = [{transform_indices = @transform_0, window_bounds = array<i64: 1, 8, 20, 16, 128>}, {pipeline_mode = #tpu.pipeline_mode<synchronous>, transform_indices = @transform_1, window_bounds = array<i64: 5, 128, 128>}, {pipeline_mode = #tpu.pipeline_mode<synchronous>, transform_indices = @transform_2, window_bounds = array<i64: 1, 128>}, {pipeline_mode = #tpu.pipeline_mode<synchronous>, transform_indices = @transform_3, window_bounds = array<i64: 1, 128>}, {transform_indices = @transform_4, window_bounds = array<i64: 1, 8, 256, 128>}]} {
    %c0 = arith.constant 0 : index
    %c0_0 = arith.constant 0 : index
    %0 = vector.load %arg4[%c0, %c0_0] : memref<1x128xf32, #tpu.memory_space<vmem>>, vector<1x128xf32>
    %c0_1 = arith.constant 0 : index
    %c0_2 = arith.constant 0 : index
    %1 = vector.load %arg5[%c0_1, %c0_2] : memref<1x128xf32, #tpu.memory_space<vmem>>, vector<1x128xf32>
    %c0_i32 = arith.constant 0 : i32
    %c8_i32 = arith.constant 8 : i32
    %2 = arith.addi %c0_i32, %c8_i32 : i32
    %c1_i32 = arith.constant 1 : i32
    scf.for %arg7 = %c0_i32 to %2 step %c1_i32  : i32 {
      %c1_i32_4 = arith.constant 1 : i32
      %3 = arith.muli %arg7, %c1_i32_4 : i32
      %c0_i32_5 = arith.constant 0 : i32
      %4 = arith.addi %c0_i32_5, %3 : i32
      %c0_6 = arith.constant 0 : index
      %5 = arith.index_cast %4 : i32 to index
      %c0_7 = arith.constant 0 : index
      %c0_8 = arith.constant 0 : index
      %c0_9 = arith.constant 0 : index
      %6 = vector.load %arg2[%c0_6, %5, %c0_7, %c0_8, %c0_9] : memref<1x8x20x16x128xbf16, #tpu.memory_space<vmem>>, vector<1x1x20x16x128xbf16>
      %7 = vector.shape_cast %6 : vector<1x1x20x16x128xbf16> to vector<20x16x128xbf16>
      %cst = arith.constant 0.000000e+00 : f32
      %8 = vector.broadcast %cst : f32 to vector<256x128xf32>
      %9 = vector.extract_strided_slice %7 {offsets = [0, 0, 0], sizes = [16, 16, 128], strides = [1, 1, 1]} : vector<20x16x128xbf16> to vector<16x16x128xbf16>
      %10 = vector.shape_cast %9 : vector<16x16x128xbf16> to vector<256x128xbf16>
      %c0_10 = arith.constant 0 : index
      %c0_11 = arith.constant 0 : index
      %c0_12 = arith.constant 0 : index
      %11 = vector.load %arg3[%c0_10, %c0_11, %c0_12] : memref<5x128x128xbf16, #tpu.memory_space<vmem>>, vector<1x128x128xbf16>
      %12 = vector.shape_cast %11 : vector<1x128x128xbf16> to vector<128x128xbf16>
      %cst_13 = arith.constant dense<0.000000e+00> : vector<256x128xf32>
      %13 = tpu.matmul %10, %12, %cst_13 {dimension_numbers = #tpu.dot_dimension_numbers<[1], [0], [0], [1], [0, 0, 1, 1], [], []>} : vector<256x128xbf16>, vector<128x128xbf16>, vector<256x128xf32> -> vector<256x128xf32>
      %14 = arith.addf %8, %13 : vector<256x128xf32>
      %15 = vector.extract_strided_slice %7 {offsets = [1, 0, 0], sizes = [16, 16, 128], strides = [1, 1, 1]} : vector<20x16x128xbf16> to vector<16x16x128xbf16>
      %16 = vector.shape_cast %15 : vector<16x16x128xbf16> to vector<256x128xbf16>
      %c1 = arith.constant 1 : index
      %c0_14 = arith.constant 0 : index
      %c0_15 = arith.constant 0 : index
      %17 = vector.load %arg3[%c1, %c0_14, %c0_15] : memref<5x128x128xbf16, #tpu.memory_space<vmem>>, vector<1x128x128xbf16>
      %18 = vector.shape_cast %17 : vector<1x128x128xbf16> to vector<128x128xbf16>
      %cst_16 = arith.constant dense<0.000000e+00> : vector<256x128xf32>
      %19 = tpu.matmul %16, %18, %cst_16 {dimension_numbers = #tpu.dot_dimension_numbers<[1], [0], [0], [1], [0, 0, 1, 1], [], []>} : vector<256x128xbf16>, vector<128x128xbf16>, vector<256x128xf32> -> vector<256x128xf32>
      %20 = arith.addf %14, %19 : vector<256x128xf32>
      %21 = vector.extract_strided_slice %7 {offsets = [2, 0, 0], sizes = [16, 16, 128], strides = [1, 1, 1]} : vector<20x16x128xbf16> to vector<16x16x128xbf16>
      %22 = vector.shape_cast %21 : vector<16x16x128xbf16> to vector<256x128xbf16>
      %c2 = arith.constant 2 : index
      %c0_17 = arith.constant 0 : index
      %c0_18 = arith.constant 0 : index
      %23 = vector.load %arg3[%c2, %c0_17, %c0_18] : memref<5x128x128xbf16, #tpu.memory_space<vmem>>, vector<1x128x128xbf16>
      %24 = vector.shape_cast %23 : vector<1x128x128xbf16> to vector<128x128xbf16>
      %cst_19 = arith.constant dense<0.000000e+00> : vector<256x128xf32>
      %25 = tpu.matmul %22, %24, %cst_19 {dimension_numbers = #tpu.dot_dimension_numbers<[1], [0], [0], [1], [0, 0, 1, 1], [], []>} : vector<256x128xbf16>, vector<128x128xbf16>, vector<256x128xf32> -> vector<256x128xf32>
      %26 = arith.addf %20, %25 : vector<256x128xf32>
      %27 = vector.extract_strided_slice %7 {offsets = [3, 0, 0], sizes = [16, 16, 128], strides = [1, 1, 1]} : vector<20x16x128xbf16> to vector<16x16x128xbf16>
      %28 = vector.shape_cast %27 : vector<16x16x128xbf16> to vector<256x128xbf16>
      %c3 = arith.constant 3 : index
      %c0_20 = arith.constant 0 : index
      %c0_21 = arith.constant 0 : index
      %29 = vector.load %arg3[%c3, %c0_20, %c0_21] : memref<5x128x128xbf16, #tpu.memory_space<vmem>>, vector<1x128x128xbf16>
      %30 = vector.shape_cast %29 : vector<1x128x128xbf16> to vector<128x128xbf16>
      %cst_22 = arith.constant dense<0.000000e+00> : vector<256x128xf32>
      %31 = tpu.matmul %28, %30, %cst_22 {dimension_numbers = #tpu.dot_dimension_numbers<[1], [0], [0], [1], [0, 0, 1, 1], [], []>} : vector<256x128xbf16>, vector<128x128xbf16>, vector<256x128xf32> -> vector<256x128xf32>
      %32 = arith.addf %26, %31 : vector<256x128xf32>
      %33 = vector.extract_strided_slice %7 {offsets = [4, 0, 0], sizes = [16, 16, 128], strides = [1, 1, 1]} : vector<20x16x128xbf16> to vector<16x16x128xbf16>
      %34 = vector.shape_cast %33 : vector<16x16x128xbf16> to vector<256x128xbf16>
      %c4 = arith.constant 4 : index
      %c0_23 = arith.constant 0 : index
      %c0_24 = arith.constant 0 : index
      %35 = vector.load %arg3[%c4, %c0_23, %c0_24] : memref<5x128x128xbf16, #tpu.memory_space<vmem>>, vector<1x128x128xbf16>
      %36 = vector.shape_cast %35 : vector<1x128x128xbf16> to vector<128x128xbf16>
      %cst_25 = arith.constant dense<0.000000e+00> : vector<256x128xf32>
      %37 = tpu.matmul %34, %36, %cst_25 {dimension_numbers = #tpu.dot_dimension_numbers<[1], [0], [0], [1], [0, 0, 1, 1], [], []>} : vector<256x128xbf16>, vector<128x128xbf16>, vector<256x128xf32> -> vector<256x128xf32>
      %38 = arith.addf %32, %37 : vector<256x128xf32>
      %39 = vector.broadcast %0 : vector<1x128xf32> to vector<256x128xf32>
      %40 = arith.mulf %38, %39 : vector<256x128xf32>
      %41 = vector.broadcast %1 : vector<1x128xf32> to vector<256x128xf32>
      %42 = arith.addf %40, %41 : vector<256x128xf32>
      %cst_26 = arith.constant 0.000000e+00 : f32
      %43 = vector.broadcast %cst_26 : f32 to vector<256x128xf32>
      %44 = arith.minimumf %42, %43 : vector<256x128xf32>
      %45 = math.exp %44 : vector<256x128xf32>
      %cst_27 = arith.constant 1.000000e+00 : f32
      %46 = vector.broadcast %cst_27 : f32 to vector<256x128xf32>
      %47 = arith.subf %45, %46 : vector<256x128xf32>
      %cst_28 = arith.constant 0.000000e+00 : f32
      %48 = vector.broadcast %cst_28 : f32 to vector<256x128xf32>
      %49 = arith.cmpf ogt, %42, %48 : vector<256x128xf32>
      %50 = arith.select %49, %42, %47 : vector<256x128xi1>, vector<256x128xf32>
      %c0_29 = arith.constant 0 : index
      %51 = arith.index_cast %4 : i32 to index
      %c0_30 = arith.constant 0 : index
      %c0_31 = arith.constant 0 : index
      %52 = vector.load %arg6[%c0_29, %51, %c0_30, %c0_31] : memref<1x8x256x128xf32, #tpu.memory_space<vmem>>, vector<1x1x256x128xf32>
      %53 = vector.shape_cast %52 : vector<1x1x256x128xf32> to vector<256x128xf32>
      %54 = vector.shape_cast %50 : vector<256x128xf32> to vector<1x1x256x128xf32>
      tpu.vector_store %arg6[%c0_29, %51, %c0_30, %c0_31], %54 {strides = array<i32>} : memref<1x8x256x128xf32, #tpu.memory_space<vmem>>, vector<1x1x256x128xf32>,
    }
    %c8_i32_3 = arith.constant 8 : i32
    return
  }
  func.func @transform_0(%arg0: i32, %arg1: i32) -> (i32, i32, i32, i32, i32) {
    %c0_i32 = arith.constant 0 : i32
    %c0_i32_0 = arith.constant 0 : i32
    %c0_i32_1 = arith.constant 0 : i32
    %c0_i32_2 = arith.constant 0 : i32
    return %arg0, %arg1, %c0_i32, %c0_i32_0, %c0_i32_1 : i32, i32, i32, i32, i32
  }
  func.func @transform_1(%arg0: i32, %arg1: i32) -> (i32, i32, i32) {
    %c0_i32 = arith.constant 0 : i32
    %c0_i32_0 = arith.constant 0 : i32
    %c0_i32_1 = arith.constant 0 : i32
    %c0_i32_2 = arith.constant 0 : i32
    return %c0_i32, %c0_i32_0, %c0_i32_1 : i32, i32, i32
  }
  func.func @transform_2(%arg0: i32, %arg1: i32) -> (i32, i32) {
    %c0_i32 = arith.constant 0 : i32
    %c0_i32_0 = arith.constant 0 : i32
    %c0_i32_1 = arith.constant 0 : i32
    return %c0_i32, %c0_i32_0 : i32, i32
  }
  func.func @transform_3(%arg0: i32, %arg1: i32) -> (i32, i32) {
    %c0_i32 = arith.constant 0 : i32
    %c0_i32_0 = arith.constant 0 : i32
    %c0_i32_1 = arith.constant 0 : i32
    return %c0_i32, %c0_i32_0 : i32, i32
  }
  func.func @transform_4(%arg0: i32, %arg1: i32) -> (i32, i32, i32, i32) {
    %c0_i32 = arith.constant 0 : i32
    %c0_i32_0 = arith.constant 0 : i32
    %c0_i32_1 = arith.constant 0 : i32
    return %arg0, %arg1, %c0_i32, %c0_i32_0 : i32, i32, i32, i32
  }
}

</mosaic_0001>

<llo_original>
// kernel: luconv_forward.1
$region0: #{luconv_forward.1}
  #allocation0 [shape = 'u32[]', space=smem, size = 0x4, offset = 0x4, fixed_abs, tag = 'smem constant byte address 0x4 - core index']
  #allocation1 [shape = 'u32[144,128]{1,0:T(1,128)}', space=vmem, size = 0x12000, scoped, tag = 'internal scratch']
  %s0 = inlined_call_operand.vmem [shape: bf16[2,16,20,16,128], index: 0, kind: input, shape index: {}]
  %s1 = inlined_call_operand.vmem [shape: bf16[5,128,128], index: 1, kind: input, shape index: {}]
  %s2 = inlined_call_operand.vmem [shape: f32[1,128], index: 2, kind: input, shape index: {}]
  %s3 = inlined_call_operand.vmem [shape: f32[1,128], index: 3, kind: input, shape index: {}]
  %s4 = inlined_call_operand.vmem [shape: f32[2,16,256,128], index: 4, kind: output, shape index: {}]
  %s5 = sld [smem:[#allocation0]]
  $region56: #{luconv_forward.1} parent=0
    _
  %s7 = ssub.s32 1, %s5
  %s8 = scalar_select 0, %s7, %s5
  loop: start=0, step=1, limit=6
  $region2: #{luconv_forward.1} parent=0 // loop_pre_header
    _
  $region3: #{luconv_forward.1} parent=0 // loop_header
    %s10 = sphi 0, %s14
    %p11 = scmp.ge.s32.totalorder %s10, 6
    %s17 = sphi 0, %s29
    %s18 = sphi 0, %s25
    %s19 = sphi 0, %s17
    %s20 = sphi 0, %s18
    %s21 = sphi 0, %s19
    %s22 = sphi 0, %s20
    %s34 = sphi 0, %s36
    %s37 = sphi 0, %s34
    %s38 = sphi 0, %s37
    %s54 = sphi 0, %s38
    %s58 = sphi 0, %s58
    %s60 = sphi 0, %s58
    %s61 = sphi 0, %s60
    %s75 = sphi 0, %s61
    %s79 = sphi 0, %s79
    %s81 = sphi 0, %s79
    %s82 = sphi 0, %s81
    %s96 = sphi 0, %s82
    %s100 = sphi 0, %s100
    %s102 = sphi 0, %s100
    %s103 = sphi 0, %s102
    %s117 = sphi 0, %s103
    %s125 = sphi 0, %s127
    %s128 = sphi 0, %s125
    %s129 = sphi 0, %s128
    %s145 = sphi 0, %s129
  $region4: #{luconv_forward.1} parent=0 // loop_header_branch
    %13 = sbr.rel (%p11) target = $region8
  $region5: #{luconv_forward.1} parent=0 // loop_body
    %s15 = ssub.s32 %s10, 1
    %s16 = ssub.s32 %s10, 2
    %s23 = sadd.s32 1, %s18
    %p24 = scmp.ge.s32.totalorder %s23, 2
    %s25 = scalar_select %p24, 0, %s23
    %s26 = sadd.s32 1, %s17
    %s27 = scalar_select %p24, %s26, %s17
    %p28 = scmp.ge.s32.totalorder %s27, 2
    %s29 = scalar_select %p28, 0, %s27
    %s30 = ssub.s32 %s17, %s29
    %s31 = ssub.s32 %s18, %s25
    %s32 = sor.u32 %s30, %s31
    %p33 = scmp.eq.s32.totalorder %s32, 0
    %s35 = sadd.s32 %s34, 1
    %s36 = scalar_select %p33, %s34, %s35
    %p39 = pneg %p33
    %p40 = scmp.eq.s32.totalorder %s10, 3
    %p41 = por %p39, %p40
    %p42 = scmp.ne.s32.totalorder %s34, %s37
    %p43 = scmp.eq.s32.totalorder %s10, 0
    %p44 = por %p42, %p43
    %p45 = scmp.ne.s32.totalorder %s34, %s37
    %p46 = scmp.eq.s32.totalorder %s15, 3
    %p47 = por %p45, %p46
    %p48 = scmp.ne.s32.totalorder %s37, %s38
    %p49 = scmp.eq.s32.totalorder %s15, 0
    %p50 = por %p48, %p49
    %p51 = scmp.ne.s32.totalorder %s37, %s38
    %p52 = scmp.eq.s32.totalorder %s16, 3
    %p53 = por %p51, %p52
    %p55 = scmp.ne.s32.totalorder %s38, %s54
    %p56 = scmp.eq.s32.totalorder %s16, 0
    %p57 = por %p55, %p56
    %s59 = sadd.s32 %s58, 1
    %p62 = scmp.eq.s32.totalorder %s10, 3
    %p63 = scmp.ne.s32.totalorder %s58, %s60
    %p64 = scmp.eq.s32.totalorder %s10, 0
    %p65 = por %p63, %p64
    %p66 = scmp.ne.s32.totalorder %s58, %s60
    %p67 = scmp.eq.s32.totalorder %s15, 3
    %p68 = por %p66, %p67
    %p69 = scmp.ne.s32.totalorder %s60, %s61
    %p70 = scmp.eq.s32.totalorder %s15, 0
    %p71 = por %p69, %p70
    %p72 = scmp.ne.s32.totalorder %s60, %s61
    %p73 = scmp.eq.s32.totalorder %s16, 3
    %p74 = por %p72, %p73
    %p76 = scmp.ne.s32.totalorder %s61, %s75
    %p77 = scmp.eq.s32.totalorder %s16, 0
    %p78 = por %p76, %p77
    %s80 = sadd.s32 %s79, 1
    %p83 = scmp.eq.s32.totalorder %s10, 3
    %p84 = scmp.ne.s32.totalorder %s79, %s81
    %p85 = scmp.eq.s32.totalorder %s10, 0
    %p86 = por %p84, %p85
    %p87 = scmp.ne.s32.totalorder %s79, %s81
    %p88 = scmp.eq.s32.totalorder %s15, 3
    %p89 = por %p87, %p88
    %p90 = scmp.ne.s32.totalorder %s81, %s82
    %p91 = scmp.eq.s32.totalorder %s15, 0
    %p92 = por %p90, %p91
    %p93 = scmp.ne.s32.totalorder %s81, %s82
    %p94 = scmp.eq.s32.totalorder %s16, 3
    %p95 = por %p93, %p94
    %p97 = scmp.ne.s32.totalorder %s82, %s96
    %p98 = scmp.eq.s32.totalorder %s16, 0
    %p99 = por %p97, %p98
    %s101 = sadd.s32 %s100, 1
    %p104 = scmp.eq.s32.totalorder %s10, 3
    %p105 = scmp.ne.s32.totalorder %s100, %s102
    %p106 = scmp.eq.s32.totalorder %s10, 0
    %p107 = por %p105, %p106
    %p108 = scmp.ne.s32.totalorder %s100, %s102
    %p109 = scmp.eq.s32.totalorder %s15, 3
    %p110 = por %p108, %p109
    %p111 = scmp.ne.s32.totalorder %s102, %s103
    %p112 = scmp.eq.s32.totalorder %s15, 0
    %p113 = por %p111, %p112
    %p114 = scmp.ne.s32.totalorder %s102, %s103
    %p115 = scmp.eq.s32.totalorder %s16, 3
    %p116 = por %p114, %p115
    %p118 = scmp.ne.s32.totalorder %s103, %s117
    %p119 = scmp.eq.s32.totalorder %s16, 0
    %p120 = por %p118, %p119
    %s121 = ssub.s32 %s17, %s29
    %s122 = ssub.s32 %s18, %s25
    %s123 = sor.u32 %s121, %s122
    %p124 = scmp.eq.s32.totalorder %s123, 0
    %s126 = sadd.s32 %s125, 1
    %s127 = scalar_select %p124, %s125, %s126
    %p130 = pneg %p124
    %p131 = scmp.eq.s32.totalorder %s10, 3
    %p132 = por %p130, %p131
    %p133 = scmp.ne.s32.totalorder %s125, %s128
    %p134 = scmp.eq.s32.totalorder %s10, 0
    %p135 = por %p133, %p134
    %p136 = scmp.ne.s32.totalorder %s125, %s128
    %p137 = scmp.eq.s32.totalorder %s15, 3
    %p138 = por %p136, %p137
    %p139 = scmp.ne.s32.totalorder %s128, %s129
    %p140 = scmp.eq.s32.totalorder %s15, 0
    %p141 = por %p139, %p140
    %p142 = scmp.ne.s32.totalorder %s128, %s129
    %p143 = scmp.eq.s32.totalorder %s16, 3
    %p144 = por %p142, %p143
    %p146 = scmp.ne.s32.totalorder %s129, %s145
    %p147 = scmp.eq.s32.totalorder %s16, 0
    %p148 = por %p146, %p147
    %p149 = scmp.le.s32.totalorder 1, %s10
    %p150 = scmp.lt.s32.totalorder %s10, 5
    %p151 = pnand %p149, %p150
    %p152 = pneg %p151
    // Predicated region
    $region9: #{luconv_forward.1} parent=5 // pred_check
      _
    $region10: #{luconv_forward.1} parent=5 // pred_check_branch
      %154 = sbr.rel (%p151) target = $region12
    $region11: #{luconv_forward.1} parent=5 // pred_region
      %s155 = ssub.s32 %s10, 1
      // Predicated region
      $region13: #{luconv_forward.1} parent=11 // pred_check
        %p156 = pneg %p71
      $region14: #{luconv_forward.1} parent=11 // pred_check_branch
        %158 = sbr.rel (%p156) target = $region16
      $region15: #{luconv_forward.1} parent=11 // pred_region
        _
      $region16: #{luconv_forward.1} parent=11 // pred_fallthru
        _
      // Predicated region
      $region17: #{luconv_forward.1} parent=11 // pred_check
        %p159 = pneg %p92
      $region18: #{luconv_forward.1} parent=11 // pred_check_branch
        %161 = sbr.rel (%p159) target = $region20
      $region19: #{luconv_forward.1} parent=11 // pred_region
        _
      $region20: #{luconv_forward.1} parent=11 // pred_fallthru
        _
      // Predicated region
      $region21: #{luconv_forward.1} parent=11 // pred_check
        %p162 = pneg %p113
      $region22: #{luconv_forward.1} parent=11 // pred_check_branch
        %164 = sbr.rel (%p162) target = $region24
      $region23: #{luconv_forward.1} parent=11 // pred_region
        _
      $region24: #{luconv_forward.1} parent=11 // pred_fallthru
        _
    $region12: #{luconv_forward.1} parent=5 // pred_fallthru
      _
    %p165 = scmp.lt.s32.totalorder %s10, 4
    // Predicated region
    $region25: #{luconv_forward.1} parent=5 // pred_check
      %p166 = pneg %p165
    $region26: #{luconv_forward.1} parent=5 // pred_check_branch
      %168 = sbr.rel (%p166) target = $region28
    $region27: #{luconv_forward.1} parent=5 // pred_region
      // Predicated region
      $region29: #{luconv_forward.1} parent=27 // pred_check
        %p169 = pneg %p44
      $region30: #{luconv_forward.1} parent=27 // pred_check_branch
        %171 = sbr.rel (%p169) target = $region32
      $region31: #{luconv_forward.1} parent=27 // pred_region
        %s172 = smul.u32 8, %s18
        %p173 = scmp.lt.s32.totalorder %s17, 1
        %s174 = scalar_select %p173, %s17, 1
        %p175 = scmp.lt.s32.totalorder %s172, 15
        %s176 = scalar_select %p175, %s172, 15
        %s177 = smul.addr %s176, 40
        %s178 = smul.addr %s174, 640
        %s179 = sadd.s32 %s177, %s178
        %s180 = smul.addr %s179, 4
        %s181 = scalar_lea.vmem %s0, %s180
        %s182 = smul.u32 8, %s18
      $region32: #{luconv_forward.1} parent=27 // pred_fallthru
        _
    $region28: #{luconv_forward.1} parent=5 // pred_fallthru
      _
    %p183 = scmp.le.s32.totalorder 1, %s10
    %p184 = scmp.lt.s32.totalorder %s10, 5
    %p185 = pnand %p183, %p184
    %p186 = pneg %p185
    // Predicated region
    $region33: #{luconv_forward.1} parent=5 // pred_check
      _
    $region34: #{luconv_forward.1} parent=5 // pred_check_branch
      %188 = sbr.rel (%p185) target = $region36
    $region35: #{luconv_forward.1} parent=5 // pred_region
      %s189 = ssub.s32 %s10, 1
      %s190 = smul.u32 8, %s20
      %p191 = scmp.lt.s32.totalorder %s19, 1
      %s192 = scalar_select %p191, %s19, 1
      %p193 = scmp.lt.s32.totalorder %s190, 15
      %s194 = scalar_select %p193, %s190, 15
      %s195 = smul.addr %s194, 40
      %s196 = smul.addr %s192, 640
      %s197 = sadd.s32 %s195, %s196
      %s198 = smul.addr %s197, 4
      %s199 = scalar_lea.vmem %s0, %s198
      %p200 = pneg %p50
      %p201 = pneg %p47
      %p202 = pneg %p71
      %p203 = pneg %p68
      %p204 = pneg %p92
      %p205 = pneg %p89
      %p206 = pneg %p113
      %p207 = pneg %p110
      %p208 = pneg %p141
      %p209 = pneg %p138
      %s210 = smul.u32 8, %s20
      %p211 = scmp.lt.s32.totalorder %s19, 1
      %s212 = scalar_select %p211, %s19, 1
      %p213 = scmp.lt.s32.totalorder %s210, 15
      %s214 = scalar_select %p213, %s210, 15
      %s215 = smul.addr %s214, 32
      %s216 = smul.addr %s212, 512
      %s217 = sadd.s32 %s215, %s216
      %s218 = smul.addr %s217, 8
      %s219 = scalar_lea.vmem %s4, %s218
      %s220 = smul.u32 8, %s20
      %p221 = scmp.lt.s32.totalorder %s19, 1
      %s222 = scalar_select %p221, %s19, 1
      %p223 = scmp.lt.s32.totalorder %s220, 15
      %s224 = scalar_select %p223, %s220, 15
      %s225 = smul.addr %s224, 40
      %s226 = smul.addr %s222, 640
      %s227 = sadd.s32 %s225, %s226
      %s228 = smul.addr %s227, 4
      %s229 = scalar_lea.vmem %s0, %s228
      %s230 = smul.u32 8, %s20
      %s231 = smul.u32 8, %s20
      %p232 = scmp.lt.s32.totalorder %s19, 1
      %s233 = scalar_select %p232, %s19, 1
      %p234 = scmp.lt.s32.totalorder %s231, 15
      %s235 = scalar_select %p234, %s231, 15
      %s236 = smul.addr %s235, 32
      %s237 = smul.addr %s233, 512
      %s238 = sadd.s32 %s236, %s237
      %s239 = smul.addr %s238, 8
      %s240 = scalar_lea.vmem %s4, %s239
      %s241 = smul.u32 8, %s20
      %v243 = vld [vmem:[%s2] sm:$0x1]
      %v244 = vld [vmem:[%s3] sm:$0x1]
      loop: start=0, step=1, limit=8
      $region37: #{luconv_forward.1} parent=35 // loop_pre_header
        _
      $region38: #{luconv_forward.1} parent=35 // loop_header
        %s246 = sphi 0, %s250
        %p247 = scmp.ge.s32.totalorder %s246, 8
      $region39: #{luconv_forward.1} parent=35 // loop_header_branch
        %249 = sbr.rel (%p247) target = $region43
      $region40: #{luconv_forward.1} parent=35 // loop_body
        %s251 = smul.u32 %s246, 40
        %s252 = smul.addr %s251, 4
        %s253 = scalar_lea.vmem %s229, %s252
        %v254 = vld [vmem:[%s253] sm:$0xf]
        %v255 = vld [vmem:[%s253 + $0x4] sm:$0xf]
        %v256 = vld [vmem:[%s253 + $0x8] sm:$0xf]
        %v257 = vld [vmem:[%s253 + $0xc] sm:$0xf]
        %v258 = vld [vmem:[%s253 + $0x10] sm:$0xf]
        %v259 = vld [vmem:[%s253 + $0x14] sm:$0xf]
        %v260 = vld [vmem:[%s253 + $0x18] sm:$0xf]
        %v261 = vld [vmem:[%s253 + $0x1c] sm:$0xf]
        %v262 = vld [vmem:[%s253 + $0x20] sm:$0xf]
        %v263 = vld [vmem:[%s253 + $0x24] sm:$0xf]
        %v264 = vld [vmem:[%s253 + $0x28] sm:$0xf]
        %v265 = vld [vmem:[%s253 + $0x2c] sm:$0xf]
        %v266 = vld [vmem:[%s253 + $0x30] sm:$0xf]
        %v267 = vld [vmem:[%s253 + $0x34] sm:$0xf]
        %v268 = vld [vmem:[%s253 + $0x38] sm:$0xf]
        %v269 = vld [vmem:[%s253 + $0x3c] sm:$0xf]
        %v270 = vld [vmem:[%s253 + $0x40] sm:$0xf]
        %v271 = vld [vmem:[%s253 + $0x44] sm:$0xf]
        %v272 = vld [vmem:[%s253 + $0x48] sm:$0xf]
        %v273 = vld [vmem:[%s253 + $0x4c] sm:$0xf]
        %v274 = vld [vmem:[%s253 + $0x50] sm:$0xf]
        %v275 = vld [vmem:[%s253 + $0x54] sm:$0xf]
        %v276 = vld [vmem:[%s253 + $0x58] sm:$0xf]
        %v277 = vld [vmem:[%s253 + $0x5c] sm:$0xf]
        %v278 = vld [vmem:[%s253 + $0x60] sm:$0xf]
        %v279 = vld [vmem:[%s253 + $0x64] sm:$0xf]
        %v280 = vld [vmem:[%s253 + $0x68] sm:$0xf]
        %v281 = vld [vmem:[%s253 + $0x6c] sm:$0xf]
        %v282 = vld [vmem:[%s253 + $0x70] sm:$0xf]
        %v283 = vld [vmem:[%s253 + $0x74] sm:$0xf]
        %v284 = vld [vmem:[%s253 + $0x78] sm:$0xf]
        %v285 = vld [vmem:[%s253 + $0x7c] sm:$0xf]
        %v286 = vld [vmem:[%s253 + $0x80] sm:$0xf]
        %v287 = vld [vmem:[%s253 + $0x84] sm:$0xf]
        %v288 = vld [vmem:[%s253 + $0x88] sm:$0xf]
        %v289 = vld [vmem:[%s253 + $0x8c] sm:$0xf]
        %v290 = vld [vmem:[%s253 + $0x90] sm:$0xf]
        %v291 = vld [vmem:[%s253 + $0x94] sm:$0xf]
        %v292 = vld [vmem:[%s253 + $0x98] sm:$0xf]
        %v293 = vld [vmem:[%s253 + $0x9c] sm:$0xf]
        %v294 = vld [vmem:[%s1] sm:$0xf]
        %v295 = vld [vmem:[%s1 + $0x4] sm:$0xf]
        %v296 = vld [vmem:[%s1 + $0x8] sm:$0xf]
        %v297 = vld [vmem:[%s1 + $0xc] sm:$0xf]
        %v298 = vld [vmem:[%s1 + $0x10] sm:$0xf]
        %v299 = vld [vmem:[%s1 + $0x14] sm:$0xf]
        %v300 = vld [vmem:[%s1 + $0x18] sm:$0xf]
        %v301 = vld [vmem:[%s1 + $0x1c] sm:$0xf]
        %v302 = vld [vmem:[%s1 + $0x20] sm:$0xf]
        %v303 = vld [vmem:[%s1 + $0x24] sm:$0xf]
        %v304 = vld [vmem:[%s1 + $0x28] sm:$0xf]
        %v305 = vld [vmem:[%s1 + $0x2c] sm:$0xf]
        %v306 = vld [vmem:[%s1 + $0x30] sm:$0xf]
        %v307 = vld [vmem:[%s1 + $0x34] sm:$0xf]
        %v308 = vld [vmem:[%s1 + $0x38] sm:$0xf]
        %v309 = vld [vmem:[%s1 + $0x3c] sm:$0xf]
        %s310 = scalar_lea.vmem %s1, 64
        %v311 = vld [vmem:[%s310] sm:$0xf]
        %v312 = vld [vmem:[%s310 + $0x4] sm:$0xf]
        %v313 = vld [vmem:[%s310 + $0x8] sm:$0xf]
        %v314 = vld [vmem:[%s310 + $0xc] sm:$0xf]
        %v315 = vld [vmem:[%s310 + $0x10] sm:$0xf]
        %v316 = vld [vmem:[%s310 + $0x14] sm:$0xf]
        %v317 = vld [vmem:[%s310 + $0x18] sm:$0xf]
        %v318 = vld [vmem:[%s310 + $0x1c] sm:$0xf]
        %v319 = vld [vmem:[%s310 + $0x20] sm:$0xf]
        %v320 = vld [vmem:[%s310 + $0x24] sm:$0xf]
        %v321 = vld [vmem:[%s310 + $0x28] sm:$0xf]
        %v322 = vld [vmem:[%s310 + $0x2c] sm:$0xf]
        %v323 = vld [vmem:[%s310 + $0x30] sm:$0xf]
        %v324 = vld [vmem:[%s310 + $0x34] sm:$0xf]
        %v325 = vld [vmem:[%s310 + $0x38] sm:$0xf]
        %v326 = vld [vmem:[%s310 + $0x3c] sm:$0xf]
        %v359 = vunpack.c.l.b16 %v256
        %v360 = vunpack.c.l.b16 %v257
        %v361 = vunpack.c.l.b16 %v258
        %v362 = vunpack.c.l.b16 %v259
        %v363 = vunpack.c.l.b16 %v260
        %v364 = vunpack.c.l.b16 %v261
        %v365 = vunpack.c.l.b16 %v262
        %v366 = vunpack.c.l.b16 %v263
        %v367 = vunpack.c.l.b16 %v264
        %v368 = vunpack.c.l.b16 %v265
        %v369 = vunpack.c.l.b16 %v266
        %v370 = vunpack.c.l.b16 %v267
        %v371 = vunpack.c.l.b16 %v268
        %v372 = vunpack.c.l.b16 %v269
        %v373 = vunpack.c.l.b16 %v270
        %v374 = vunpack.c.l.b16 %v271
        %v375 = vunpack.c.l.b16 %v272
        %v376 = vunpack.c.l.b16 %v273
        %v377 = vunpack.c.l.b16 %v274
        %v378 = vunpack.c.l.b16 %v275
        %v379 = vunpack.c.l.b16 %v276
        %v380 = vunpack.c.l.b16 %v277
        %v381 = vunpack.c.l.b16 %v278
        %v382 = vunpack.c.l.b16 %v279
        %v383 = vunpack.c.l.b16 %v280
        %v384 = vunpack.c.l.b16 %v281
        %v385 = vunpack.c.l.b16 %v282
        %v386 = vunpack.c.l.b16 %v283
        %v387 = vunpack.c.l.b16 %v284
        %v388 = vunpack.c.l.b16 %v285
        %v389 = vunpack.c.l.b16 %v286
        %v390 = vunpack.c.l.b16 %v287
        %v391 = vpack.c.b16 %v360, %v359
        %v392 = vpack.c.b16 %v362, %v361
        %v393 = vpack.c.b16 %v364, %v363
        %v394 = vpack.c.b16 %v366, %v365
        %v395 = vpack.c.b16 %v368, %v367
        %v396 = vpack.c.b16 %v370, %v369
        %v397 = vpack.c.b16 %v372, %v371
        %v398 = vpack.c.b16 %v374, %v373
        %v399 = vpack.c.b16 %v376, %v375
        %v400 = vpack.c.b16 %v378, %v377
        %v401 = vpack.c.b16 %v380, %v379
        %v402 = vpack.c.b16 %v382, %v381
        %v403 = vpack.c.b16 %v384, %v383
        %v404 = vpack.c.b16 %v386, %v385
        %v405 = vpack.c.b16 %v388, %v387
        %v406 = vpack.c.b16 %v390, %v389
        %v439 = vunpack.c.l.b16 %v311
        %v440 = vunpack.c.l.b16 %v312
        %v441 = vunpack.c.l.b16 %v313
        %v442 = vunpack.c.l.b16 %v314
        %v443 = vunpack.c.l.b16 %v315
        %v444 = vunpack.c.l.b16 %v316
        %v445 = vunpack.c.l.b16 %v317
        %v446 = vunpack.c.l.b16 %v318
        %v447 = vunpack.c.l.b16 %v319
        %v448 = vunpack.c.l.b16 %v320
        %v449 = vunpack.c.l.b16 %v321
        %v450 = vunpack.c.l.b16 %v322
        %v451 = vunpack.c.l.b16 %v323
        %v452 = vunpack.c.l.b16 %v324
        %v453 = vunpack.c.l.b16 %v325
        %v454 = vunpack.c.l.b16 %v326
        %v455 = vpack.c.b16 %v440, %v439
        %v456 = vpack.c.b16 %v442, %v441
        %v457 = vpack.c.b16 %v444, %v443
        %v458 = vpack.c.b16 %v446, %v445
        %v459 = vpack.c.b16 %v448, %v447
        %v460 = vpack.c.b16 %v450, %v449
        %v461 = vpack.c.b16 %v452, %v451
        %v462 = vpack.c.b16 %v454, %v453
        %471 = vmatprep.subr.bf16.mxu0 0
        %472 = vmatpush1.bf16.msra.mxu0 %v455
        %473 = vmatprep.subr.bf16.mxu0 0
        %474 = vmatpush1.bf16.msra.mxu0 %v456
        %475 = vmatprep.subr.bf16.mxu0 0
        %476 = vmatpush1.bf16.msra.mxu0 %v457
        %477 = vmatprep.subr.bf16.mxu0 0
        %478 = vmatpush1.bf16.msra.mxu0 %v458
        %479 = vmatprep.subr.bf16.mxu0 0
        %480 = vmatpush1.bf16.msra.mxu0 %v459
        %481 = vmatprep.subr.bf16.mxu0 0
        %482 = vmatpush1.bf16.msra.mxu0 %v460
        %483 = vmatprep.subr.bf16.mxu0 0
        %484 = vmatpush1.bf16.msra.mxu0 %v461
        %485 = vmatprep.subr.bf16.mxu0 0
        %486 = vmatpush1.bf16.msra.mxu0 %v462
        %487 = vmatprep.subr.bf16.mxu0 0
        %488 = vmatpush1.bf16.msra.mxu0 0
        %489 = vmatprep.subr.bf16.mxu0 0
        %490 = vmatpush1.bf16.msra.mxu0 0
        %491 = vmatprep.subr.bf16.mxu0 0
        %492 = vmatpush1.bf16.msra.mxu0 0
        %493 = vmatprep.subr.bf16.mxu0 0
        %494 = vmatpush1.bf16.msra.mxu0 0
        %495 = vmatprep.subr.bf16.mxu0 0
        %496 = vmatpush1.bf16.msra.mxu0 0
        %497 = vmatprep.subr.bf16.mxu0 0
        %498 = vmatpush1.bf16.msra.mxu0 0
        %499 = vmatprep.subr.bf16.mxu0 0
        %500 = vmatpush1.bf16.msra.mxu0 0
        %501 = vmatprep.subr.bf16.mxu0 0
        %502 = vmatpush1.bf16.msra.mxu0 0
        %503 = vmatprep.mubr.bf16.mxu0 0
        %504 = vmatmul.mubr.bf16.gmra.mrb[0].mxu0 %v391
        %v505 = vpop.f32.mrb[0].mxu0
        %v506 = vadd.f32 0.0, %v505
        %v507 = vpop.f32.mrb[0].mxu0
        %v508 = vpop.f32.mrb[0].mxu0
        %v509 = vadd.f32 0.0, %v508
        %v510 = vpop.f32.mrb[0].mxu0
        %511 = vmatprep.mubr.bf16.mxu0 0
        %512 = vmatmul.mubr.bf16.gmra.mrb[0].mxu0 %v392
        %v513 = vpop.f32.mrb[0].mxu0
        %v514 = vadd.f32 0.0, %v513
        %v515 = vpop.f32.mrb[0].mxu0
        %v516 = vpop.f32.mrb[0].mxu0
        %v517 = vadd.f32 0.0, %v516
        %v518 = vpop.f32.mrb[0].mxu0
        %519 = vmatprep.mubr.bf16.mxu0 0
        %520 = vmatmul.mubr.bf16.gmra.mrb[0].mxu0 %v393
        %v521 = vpop.f32.mrb[0].mxu0
        %v522 = vadd.f32 0.0, %v521
        %v523 = vpop.f32.mrb[0].mxu0
        %v524 = vpop.f32.mrb[0].mxu0
        %v525 = vadd.f32 0.0, %v524
        %v526 = vpop.f32.mrb[0].mxu0
        %527 = vmatprep.mubr.bf16.mxu0 0
        %528 = vmatmul.mubr.bf16.gmra.mrb[0].mxu0 %v394
        %v529 = vpop.f32.mrb[0].mxu0
        %v530 = vadd.f32 0.0, %v529
        %v531 = vpop.f32.mrb[0].mxu0
        %v532 = vpop.f32.mrb[0].mxu0
        %v533 = vadd.f32 0.0, %v532
        %v534 = vpop.f32.mrb[0].mxu0
        %535 = vmatprep.mubr.bf16.mxu0 0
        %536 = vmatmul.mubr.bf16.gmra.mrb[0].mxu0 %v395
        %v537 = vpop.f32.mrb[0].mxu0
        %v538 = vadd.f32 0.0, %v537
        %v539 = vpop.f32.mrb[0].mxu0
        %v540 = vpop.f32.mrb[0].mxu0
        %v541 = vadd.f32 0.0, %v540
        %v542 = vpop.f32.mrb[0].mxu0
        %543 = vmatprep.mubr.bf16.mxu0 0
        %544 = vmatmul.mubr.bf16.gmra.mrb[0].mxu0 %v396
        %v545 = vpop.f32.mrb[0].mxu0
        %v546 = vadd.f32 0.0, %v545
        %v547 = vpop.f32.mrb[0].mxu0
        %v548 = vpop.f32.mrb[0].mxu0
        %v549 = vadd.f32 0.0, %v548
        %v550 = vpop.f32.mrb[0].mxu0
        %551 = vmatprep.mubr.bf16.mxu0 0
        %552 = vmatmul.mubr.bf16.gmra.mrb[0].mxu0 %v397
        %v553 = vpop.f32.mrb[0].mxu0
        %v554 = vadd.f32 0.0, %v553
        %v555 = vpop.f32.mrb[0].mxu0
        %v556 = vpop.f32.mrb[0].mxu0
        %v557 = vadd.f32 0.0, %v556
        %v558 = vpop.f32.mrb[0].mxu0
        %559 = vmatprep.mubr.bf16.mxu0 0
        %560 = vmatmul.mubr.bf16.gmra.mrb[0].mxu0 %v398
        %v561 = vpop.f32.mrb[0].mxu0
        %v562 = vadd.f32 0.0, %v561
        %v563 = vpop.f32.mrb[0].mxu0
        %v564 = vpop.f32.mrb[0].mxu0
        %v565 = vadd.f32 0.0, %v564
        %v566 = vpop.f32.mrb[0].mxu0
        %567 = vmatprep.mubr.bf16.mxu0 0
        %568 = vmatmul.mubr.bf16.gmra.mrb[0].mxu0 %v399
        %v569 = vpop.f32.mrb[0].mxu0
        %v570 = vadd.f32 0.0, %v569
        %v571 = vpop.f32.mrb[0].mxu0
        %v572 = vpop.f32.mrb[0].mxu0
        %v573 = vadd.f32 0.0, %v572
        %v574 = vpop.f32.mrb[0].mxu0
        %575 = vmatprep.mubr.bf16.mxu0 0
        %576 = vmatmul.mubr.bf16.gmra.mrb[0].mxu0 %v400
        %v577 = vpop.f32.mrb[0].mxu0
        %v578 = vadd.f32 0.0, %v577
        %v579 = vpop.f32.mrb[0].mxu0
        %v580 = vpop.f32.mrb[0].mxu0
        %v581 = vadd.f32 0.0, %v580
        %v582 = vpop.f32.mrb[0].mxu0
        %583 = vmatprep.mubr.bf16.mxu0 0
        %584 = vmatmul.mubr.bf16.gmra.mrb[0].mxu0 %v401
        %v585 = vpop.f32.mrb[0].mxu0
        %v586 = vadd.f32 0.0, %v585
        %v587 = vpop.f32.mrb[0].mxu0
        %v588 = vpop.f32.mrb[0].mxu0
        %v589 = vadd.f32 0.0, %v588
        %v590 = vpop.f32.mrb[0].mxu0
        %591 = vmatprep.mubr.bf16.mxu0 0
        %592 = vmatmul.mubr.bf16.gmra.mrb[0].mxu0 %v402
        %v593 = vpop.f32.mrb[0].mxu0
        %v594 = vadd.f32 0.0, %v593
        %v595 = vpop.f32.mrb[0].mxu0
        %v596 = vpop.f32.mrb[0].mxu0
        %v597 = vadd.f32 0.0, %v596
        %v598 = vpop.f32.mrb[0].mxu0
        %599 = vmatprep.mubr.bf16.mxu0 0
        %600 = vmatmul.mubr.bf16.gmra.mrb[0].mxu0 %v403
        %v601 = vpop.f32.mrb[0].mxu0
        %v602 = vadd.f32 0.0, %v601
        %v603 = vpop.f32.mrb[0].mxu0
        %v604 = vpop.f32.mrb[0].mxu0
        %v605 = vadd.f32 0.0, %v604
        %v606 = vpop.f32.mrb[0].mxu0
        %607 = vmatprep.mubr.bf16.mxu0 0
        %608 = vmatmul.mubr.bf16.gmra.mrb[0].mxu0 %v404
        %v609 = vpop.f32.mrb[0].mxu0
        %v610 = vadd.f32 0.0, %v609
        %v611 = vpop.f32.mrb[0].mxu0
        %v612 = vpop.f32.mrb[0].mxu0
        %v613 = vadd.f32 0.0, %v612
        %v614 = vpop.f32.mrb[0].mxu0
        %615 = vmatprep.mubr.bf16.mxu0 0
        %616 = vmatmul.mubr.bf16.gmra.mrb[0].mxu0 %v405
        %v617 = vpop.f32.mrb[0].mxu0
        %v618 = vadd.f32 0.0, %v617
        %v619 = vpop.f32.mrb[0].mxu0
        %v620 = vpop.f32.mrb[0].mxu0
        %v621 = vadd.f32 0.0, %v620
        %v622 = vpop.f32.mrb[0].mxu0
        %623 = vmatprep.mubr.bf16.mxu0 0
        %624 = vmatmul.mubr.bf16.gmra.mrb[0].mxu0 %v406
        %v625 = vpop.f32.mrb[0].mxu0
        %v626 = vadd.f32 0.0, %v625
        %v627 = vpop.f32.mrb[0].mxu0
        %v628 = vpop.f32.mrb[0].mxu0
        %v629 = vadd.f32 0.0, %v628
        %v630 = vpop.f32.mrb[0].mxu0
        %631 = vdwg.mxu0
        %v634 = vunpack.c.l.b16 %v254
        %v635 = vunpack.c.l.b16 %v255
        %v636 = vpack.c.b16 %v635, %v634
        %v654 = vunpack.c.l.b16 %v294
        %v655 = vunpack.c.l.b16 %v295
        %v656 = vunpack.c.l.b16 %v296
        %v657 = vunpack.c.l.b16 %v297
        %v658 = vunpack.c.l.b16 %v298
        %v659 = vunpack.c.l.b16 %v299
        %v660 = vunpack.c.l.b16 %v300
        %v661 = vunpack.c.l.b16 %v301
        %v662 = vunpack.c.l.b16 %v302
        %v663 = vunpack.c.l.b16 %v303
        %v664 = vunpack.c.l.b16 %v304
        %v665 = vunpack.c.l.b16 %v305
        %v666 = vunpack.c.l.b16 %v306
        %v667 = vunpack.c.l.b16 %v307
        %v668 = vunpack.c.l.b16 %v308
        %v669 = vunpack.c.l.b16 %v309
        %v670 = vpack.c.b16 %v655, %v654
        %v671 = vpack.c.b16 %v657, %v656
        %v672 = vpack.c.b16 %v659, %v658
        %v673 = vpack.c.b16 %v661, %v660
        %v674 = vpack.c.b16 %v663, %v662
        %v675 = vpack.c.b16 %v665, %v664
        %v676 = vpack.c.b16 %v667, %v666
        %v677 = vpack.c.b16 %v669, %v668
        %686 = vmatprep.subr.bf16.mxu0 0
        %687 = vmatpush1.bf16.msra.mxu0 %v670
        %688 = vmatprep.subr.bf16.mxu0 0
        %689 = vmatpush1.bf16.msra.mxu0 %v671
        %690 = vmatprep.subr.bf16.mxu0 0
        %691 = vmatpush1.bf16.msra.mxu0 %v672
        %692 = vmatprep.subr.bf16.mxu0 0
        %693 = vmatpush1.bf16.msra.mxu0 %v673
        %694 = vmatprep.subr.bf16.mxu0 0
        %695 = vmatpush1.bf16.msra.mxu0 %v674
        %696 = vmatprep.subr.bf16.mxu0 0
        %697 = vmatpush1.bf16.msra.mxu0 %v675
        %698 = vmatprep.subr.bf16.mxu0 0
        %699 = vmatpush1.bf16.msra.mxu0 %v676
        %700 = vmatprep.subr.bf16.mxu0 0
        %701 = vmatpush1.bf16.msra.mxu0 %v677
        %702 = vmatprep.subr.bf16.mxu0 0
        %703 = vmatpush1.bf16.msra.mxu0 0
        %704 = vmatprep.subr.bf16.mxu0 0
        %705 = vmatpush1.bf16.msra.mxu0 0
        %706 = vmatprep.subr.bf16.mxu0 0
        %707 = vmatpush1.bf16.msra.mxu0 0
        %708 = vmatprep.subr.bf16.mxu0 0
        %709 = vmatpush1.bf16.msra.mxu0 0
        %710 = vmatprep.subr.bf16.mxu0 0
        %711 = vmatpush1.bf16.msra.mxu0 0
        %712 = vmatprep.subr.bf16.mxu0 0
        %713 = vmatpush1.bf16.msra.mxu0 0
        %714 = vmatprep.subr.bf16.mxu0 0
        %715 = vmatpush1.bf16.msra.mxu0 0
        %716 = vmatprep.subr.bf16.mxu0 0
        %717 = vmatpush1.bf16.msra.mxu0 0
        %718 = vmatprep.mubr.bf16.mxu0 0
        %719 = vmatmul.mubr.bf16.gmra.mrb[0].mxu0 %v636
        %v720 = vpop.f32.mrb[0].mxu0
        %v721 = vadd.f32 %v506, %v720
        %v722 = vpop.f32.mrb[0].mxu0
        %v723 = vpop.f32.mrb[0].mxu0
        %v724 = vadd.f32 %v509, %v723
        %v725 = vpop.f32.mrb[0].mxu0
        %726 = vmatprep.mubr.bf16.mxu0 0
        %727 = vmatmul.mubr.bf16.gmra.mrb[0].mxu0 %v391
        %v728 = vpop.f32.mrb[0].mxu0
        %v729 = vadd.f32 %v514, %v728
        %v730 = vpop.f32.mrb[0].mxu0
        %v731 = vpop.f32.mrb[0].mxu0
        %v732 = vadd.f32 %v517, %v731
        %v733 = vpop.f32.mrb[0].mxu0
        %734 = vmatprep.mubr.bf16.mxu0 0
        %735 = vmatmul.mubr.bf16.gmra.mrb[0].mxu0 %v392
        %v736 = vpop.f32.mrb[0].mxu0
        %v737 = vadd.f32 %v522, %v736
        %v738 = vpop.f32.mrb[0].mxu0
        %v739 = vpop.f32.mrb[0].mxu0
        %v740 = vadd.f32 %v525, %v739
        %v741 = vpop.f32.mrb[0].mxu0
        %742 = vmatprep.mubr.bf16.mxu0 0
        %743 = vmatmul.mubr.bf16.gmra.mrb[0].mxu0 %v393
        %v744 = vpop.f32.mrb[0].mxu0
        %v745 = vadd.f32 %v530, %v744
        %v746 = vpop.f32.mrb[0].mxu0
        %v747 = vpop.f32.mrb[0].mxu0
        %v748 = vadd.f32 %v533, %v747
        %v749 = vpop.f32.mrb[0].mxu0
        %750 = vmatprep.mubr.bf16.mxu0 0
        %751 = vmatmul.mubr.bf16.gmra.mrb[0].mxu0 %v394
        %v752 = vpop.f32.mrb[0].mxu0
        %v753 = vadd.f32 %v538, %v752
        %v754 = vpop.f32.mrb[0].mxu0
        %v755 = vpop.f32.mrb[0].mxu0
        %v756 = vadd.f32 %v541, %v755
        %v757 = vpop.f32.mrb[0].mxu0
        %758 = vmatprep.mubr.bf16.mxu0 0
        %759 = vmatmul.mubr.bf16.gmra.mrb[0].mxu0 %v395
        %v760 = vpop.f32.mrb[0].mxu0
        %v761 = vadd.f32 %v546, %v760
        %v762 = vpop.f32.mrb[0].mxu0
        %v763 = vpop.f32.mrb[0].mxu0
        %v764 = vadd.f32 %v549, %v763
        %v765 = vpop.f32.mrb[0].mxu0
        %766 = vmatprep.mubr.bf16.mxu0 0
        %767 = vmatmul.mubr.bf16.gmra.mrb[0].mxu0 %v396
        %v768 = vpop.f32.mrb[0].mxu0
        %v769 = vadd.f32 %v554, %v768
        %v770 = vpop.f32.mrb[0].mxu0
        %v771 = vpop.f32.mrb[0].mxu0
        %v772 = vadd.f32 %v557, %v771
        %v773 = vpop.f32.mrb[0].mxu0
        %774 = vmatprep.mubr.bf16.mxu0 0
        %775 = vmatmul.mubr.bf16.gmra.mrb[0].mxu0 %v397
        %v776 = vpop.f32.mrb[0].mxu0
        %v777 = vadd.f32 %v562, %v776
        %v778 = vpop.f32.mrb[0].mxu0
        %v779 = vpop.f32.mrb[0].mxu0
        %v780 = vadd.f32 %v565, %v779
        %v781 = vpop.f32.mrb[0].mxu0
        %782 = vmatprep.mubr.bf16.mxu0 0
        %783 = vmatmul.mubr.bf16.gmra.mrb[0].mxu0 %v398
        %v784 = vpop.f32.mrb[0].mxu0
        %v785 = vadd.f32 %v570, %v784
        %v786 = vpop.f32.mrb[0].mxu0
        %v787 = vpop.f32.mrb[0].mxu0
        %v788 = vadd.f32 %v573, %v787
        %v789 = vpop.f32.mrb[0].mxu0
        %790 = vmatprep.mubr.bf16.mxu0 0
        %791 = vmatmul.mubr.bf16.gmra.mrb[0].mxu0 %v399
        %v792 = vpop.f32.mrb[0].mxu0
        %v793 = vadd.f32 %v578, %v792
        %v794 = vpop.f32.mrb[0].mxu0
        %v795 = vpop.f32.mrb[0].mxu0
        %v796 = vadd.f32 %v581, %v795
        %v797 = vpop.f32.mrb[0].mxu0
        %798 = vmatprep.mubr.bf16.mxu0 0
        %799 = vmatmul.mubr.bf16.gmra.mrb[0].mxu0 %v400
        %v800 = vpop.f32.mrb[0].mxu0
        %v801 = vadd.f32 %v586, %v800
        %v802 = vpop.f32.mrb[0].mxu0
        %v803 = vpop.f32.mrb[0].mxu0
        %v804 = vadd.f32 %v589, %v803
        %v805 = vpop.f32.mrb[0].mxu0
        %806 = vmatprep.mubr.bf16.mxu0 0
        %807 = vmatmul.mubr.bf16.gmra.mrb[0].mxu0 %v401
        %v808 = vpop.f32.mrb[0].mxu0
        %v809 = vadd.f32 %v594, %v808
        %v810 = vpop.f32.mrb[0].mxu0
        %v811 = vpop.f32.mrb[0].mxu0
        %v812 = vadd.f32 %v597, %v811
        %v813 = vpop.f32.mrb[0].mxu0
        %814 = vmatprep.mubr.bf16.mxu0 0
        %815 = vmatmul.mubr.bf16.gmra.mrb[0].mxu0 %v402
        %v816 = vpop.f32.mrb[0].mxu0
        %v817 = vadd.f32 %v602, %v816
        %v818 = vpop.f32.mrb[0].mxu0
        %v819 = vpop.f32.mrb[0].mxu0
        %v820 = vadd.f32 %v605, %v819
        %v821 = vpop.f32.mrb[0].mxu0
        %822 = vmatprep.mubr.bf16.mxu0 0
        %823 = vmatmul.mubr.bf16.gmra.mrb[0].mxu0 %v403
        %v824 = vpop.f32.mrb[0].mxu0
        %v825 = vadd.f32 %v610, %v824
        %v826 = vpop.f32.mrb[0].mxu0
        %v827 = vpop.f32.mrb[0].mxu0
        %v828 = vadd.f32 %v613, %v827
        %v829 = vpop.f32.mrb[0].mxu0
        %830 = vmatprep.mubr.bf16.mxu0 0
        %831 = vmatmul.mubr.bf16.gmra.mrb[0].mxu0 %v404
        %v832 = vpop.f32.mrb[0].mxu0
        %v833 = vadd.f32 %v618, %v832
        %v834 = vpop.f32.mrb[0].mxu0
        %v835 = vpop.f32.mrb[0].mxu0
        %v836 = vadd.f32 %v621, %v835
        %v837 = vpop.f32.mrb[0].mxu0
        %838 = vmatprep.mubr.bf16.mxu0 0
        %839 = vmatmul.mubr.bf16.gmra.mrb[0].mxu0 %v405
        %v840 = vpop.f32.mrb[0].mxu0
        %v841 = vadd.f32 %v626, %v840
        %v842 = vpop.f32.mrb[0].mxu0
        %v843 = vpop.f32.mrb[0].mxu0
        %v844 = vadd.f32 %v629, %v843
        %v845 = vpop.f32.mrb[0].mxu0
        %846 = vdwg.mxu0
        %s847 = scalar_lea.vmem %s1, 128
        %v848 = vld [vmem:[%s847] sm:$0xf]
        %v849 = vld [vmem:[%s847 + $0x4] sm:$0xf]
        %v850 = vld [vmem:[%s847 + $0x8] sm:$0xf]
        %v851 = vld [vmem:[%s847 + $0xc] sm:$0xf]
        %v852 = vld [vmem:[%s847 + $0x10] sm:$0xf]
        %v853 = vld [vmem:[%s847 + $0x14] sm:$0xf]
        %v854 = vld [vmem:[%s847 + $0x18] sm:$0xf]
        %v855 = vld [vmem:[%s847 + $0x1c] sm:$0xf]
        %v856 = vld [vmem:[%s847 + $0x20] sm:$0xf]
        %v857 = vld [vmem:[%s847 + $0x24] sm:$0xf]
        %v858 = vld [vmem:[%s847 + $0x28] sm:$0xf]
        %v859 = vld [vmem:[%s847 + $0x2c] sm:$0xf]
        %v860 = vld [vmem:[%s847 + $0x30] sm:$0xf]
        %v861 = vld [vmem:[%s847 + $0x34] sm:$0xf]
        %v862 = vld [vmem:[%s847 + $0x38] sm:$0xf]
        %v863 = vld [vmem:[%s847 + $0x3c] sm:$0xf]
        %v866 = vunpack.c.l.b16 %v288
        %v867 = vunpack.c.l.b16 %v289
        %v868 = vpack.c.b16 %v867, %v866
        %v886 = vunpack.c.l.b16 %v848
        %v887 = vunpack.c.l.b16 %v849
        %v888 = vunpack.c.l.b16 %v850
        %v889 = vunpack.c.l.b16 %v851
        %v890 = vunpack.c.l.b16 %v852
        %v891 = vunpack.c.l.b16 %v853
        %v892 = vunpack.c.l.b16 %v854
        %v893 = vunpack.c.l.b16 %v855
        %v894 = vunpack.c.l.b16 %v856
        %v895 = vunpack.c.l.b16 %v857
        %v896 = vunpack.c.l.b16 %v858
        %v897 = vunpack.c.l.b16 %v859
        %v898 = vunpack.c.l.b16 %v860
        %v899 = vunpack.c.l.b16 %v861
        %v900 = vunpack.c.l.b16 %v862
        %v901 = vunpack.c.l.b16 %v863
        %v902 = vpack.c.b16 %v887, %v886
        %v903 = vpack.c.b16 %v889, %v888
        %v904 = vpack.c.b16 %v891, %v890
        %v905 = vpack.c.b16 %v893, %v892
        %v906 = vpack.c.b16 %v895, %v894
        %v907 = vpack.c.b16 %v897, %v896
        %v908 = vpack.c.b16 %v899, %v898
        %v909 = vpack.c.b16 %v901, %v900
        %918 = vmatprep.subr.bf16.mxu0 0
        %919 = vmatpush1.bf16.msra.mxu0 %v902
        %920 = vmatprep.subr.bf16.mxu0 0
        %921 = vmatpush1.bf16.msra.mxu0 %v903
        %922 = vmatprep.subr.bf16.mxu0 0
        %923 = vmatpush1.bf16.msra.mxu0 %v904
        %924 = vmatprep.subr.bf16.mxu0 0
        %925 = vmatpush1.bf16.msra.mxu0 %v905
        %926 = vmatprep.subr.bf16.mxu0 0
        %927 = vmatpush1.bf16.msra.mxu0 %v906
        %928 = vmatprep.subr.bf16.mxu0 0
        %929 = vmatpush1.bf16.msra.mxu0 %v907
        %930 = vmatprep.subr.bf16.mxu0 0
        %931 = vmatpush1.bf16.msra.mxu0 %v908
        %932 = vmatprep.subr.bf16.mxu0 0
        %933 = vmatpush1.bf16.msra.mxu0 %v909
        %934 = vmatprep.subr.bf16.mxu0 0
        %935 = vmatpush1.bf16.msra.mxu0 0
        %936 = vmatprep.subr.bf16.mxu0 0
        %937 = vmatpush1.bf16.msra.mxu0 0
        %938 = vmatprep.subr.bf16.mxu0 0
        %939 = vmatpush1.bf16.msra.mxu0 0
        %940 = vmatprep.subr.bf16.mxu0 0
        %941 = vmatpush1.bf16.msra.mxu0 0
        %942 = vmatprep.subr.bf16.mxu0 0
        %943 = vmatpush1.bf16.msra.mxu0 0
        %944 = vmatprep.subr.bf16.mxu0 0
        %945 = vmatpush1.bf16.msra.mxu0 0
        %946 = vmatprep.subr.bf16.mxu0 0
        %947 = vmatpush1.bf16.msra.mxu0 0
        %948 = vmatprep.subr.bf16.mxu0 0
        %949 = vmatpush1.bf16.msra.mxu0 0
        %950 = vmatprep.mubr.bf16.mxu0 0
        %951 = vmatmul.mubr.bf16.gmra.mrb[0].mxu0 %v392
        %v952 = vpop.f32.mrb[0].mxu0
        %v953 = vadd.f32 0.0, %v952
        %v954 = vpop.f32.mrb[0].mxu0
        %v955 = vpop.f32.mrb[0].mxu0
        %v956 = vadd.f32 0.0, %v955
        %v957 = vpop.f32.mrb[0].mxu0
        %958 = vmatprep.mubr.bf16.mxu0 0
        %959 = vmatmul.mubr.bf16.gmra.mrb[0].mxu0 %v393
        %v960 = vpop.f32.mrb[0].mxu0
        %v961 = vadd.f32 0.0, %v960
        %v962 = vpop.f32.mrb[0].mxu0
        %v963 = vpop.f32.mrb[0].mxu0
        %v964 = vadd.f32 0.0, %v963
        %v965 = vpop.f32.mrb[0].mxu0
        %966 = vmatprep.mubr.bf16.mxu0 0
        %967 = vmatmul.mubr.bf16.gmra.mrb[0].mxu0 %v394
        %v968 = vpop.f32.mrb[0].mxu0
        %v969 = vadd.f32 0.0, %v968
        %v970 = vpop.f32.mrb[0].mxu0
        %v971 = vpop.f32.mrb[0].mxu0
        %v972 = vadd.f32 0.0, %v971
        %v973 = vpop.f32.mrb[0].mxu0
        %974 = vmatprep.mubr.bf16.mxu0 0
        %975 = vmatmul.mubr.bf16.gmra.mrb[0].mxu0 %v395
        %v976 = vpop.f32.mrb[0].mxu0
        %v977 = vadd.f32 0.0, %v976
        %v978 = vpop.f32.mrb[0].mxu0
        %v979 = vpop.f32.mrb[0].mxu0
        %v980 = vadd.f32 0.0, %v979
        %v981 = vpop.f32.mrb[0].mxu0
        %982 = vmatprep.mubr.bf16.mxu0 0
        %983 = vmatmul.mubr.bf16.gmra.mrb[0].mxu0 %v396
        %v984 = vpop.f32.mrb[0].mxu0
        %v985 = vadd.f32 0.0, %v984
        %v986 = vpop.f32.mrb[0].mxu0
        %v987 = vpop.f32.mrb[0].mxu0
        %v988 = vadd.f32 0.0, %v987
        %v989 = vpop.f32.mrb[0].mxu0
        %990 = vmatprep.mubr.bf16.mxu0 0
        %991 = vmatmul.mubr.bf16.gmra.mrb[0].mxu0 %v397
        %v992 = vpop.f32.mrb[0].mxu0
        %v993 = vadd.f32 0.0, %v992
        %v994 = vpop.f32.mrb[0].mxu0
        %v995 = vpop.f32.mrb[0].mxu0
        %v996 = vadd.f32 0.0, %v995
        %v997 = vpop.f32.mrb[0].mxu0
        %998 = vmatprep.mubr.bf16.mxu0 0
        %999 = vmatmul.mubr.bf16.gmra.mrb[0].mxu0 %v398
        %v1000 = vpop.f32.mrb[0].mxu0
        %v1001 = vadd.f32 0.0, %v1000
        %v1002 = vpop.f32.mrb[0].mxu0
        %v1003 = vpop.f32.mrb[0].mxu0
        %v1004 = vadd.f32 0.0, %v1003
        %v1005 = vpop.f32.mrb[0].mxu0
        %1006 = vmatprep.mubr.bf16.mxu0 0
        %1007 = vmatmul.mubr.bf16.gmra.mrb[0].mxu0 %v399
        %v1008 = vpop.f32.mrb[0].mxu0
        %v1009 = vadd.f32 0.0, %v1008
        %v1010 = vpop.f32.mrb[0].mxu0
        %v1011 = vpop.f32.mrb[0].mxu0
        %v1012 = vadd.f32 0.0, %v1011
        %v1013 = vpop.f32.mrb[0].mxu0
        %1014 = vmatprep.mubr.bf16.mxu0 0
        %1015 = vmatmul.mubr.bf16.gmra.mrb[0].mxu0 %v400
        %v1016 = vpop.f32.mrb[0].mxu0
        %v1017 = vadd.f32 0.0, %v1016
        %v1018 = vpop.f32.mrb[0].mxu0
        %v1019 = vpop.f32.mrb[0].mxu0
        %v1020 = vadd.f32 0.0, %v1019
        %v1021 = vpop.f32.mrb[0].mxu0
        %1022 = vmatprep.mubr.bf16.mxu0 0
        %1023 = vmatmul.mubr.bf16.gmra.mrb[0].mxu0 %v401
        %v1024 = vpop.f32.mrb[0].mxu0
        %v1025 = vadd.f32 0.0, %v1024
        %v1026 = vpop.f32.mrb[0].mxu0
        %v1027 = vpop.f32.mrb[0].mxu0
        %v1028 = vadd.f32 0.0, %v1027
        %v1029 = vpop.f32.mrb[0].mxu0
        %1030 = vmatprep.mubr.bf16.mxu0 0
        %1031 = vmatmul.mubr.bf16.gmra.mrb[0].mxu0 %v402
        %v1032 = vpop.f32.mrb[0].mxu0
        %v1033 = vadd.f32 0.0, %v1032
        %v1034 = vpop.f32.mrb[0].mxu0
        %v1035 = vpop.f32.mrb[0].mxu0
        %v1036 = vadd.f32 0.0, %v1035
        %v1037 = vpop.f32.mrb[0].mxu0
        %1038 = vmatprep.mubr.bf16.mxu0 0
        %1039 = vmatmul.mubr.bf16.gmra.mrb[0].mxu0 %v403
        %v1040 = vpop.f32.mrb[0].mxu0
        %v1041 = vadd.f32 0.0, %v1040
        %v1042 = vpop.f32.mrb[0].mxu0
        %v1043 = vpop.f32.mrb[0].mxu0
        %v1044 = vadd.f32 0.0, %v1043
        %v1045 = vpop.f32.mrb[0].mxu0
        %1046 = vmatprep.mubr.bf16.mxu0 0
        %1047 = vmatmul.mubr.bf16.gmra.mrb[0].mxu0 %v404
        %v1048 = vpop.f32.mrb[0].mxu0
        %v1049 = vadd.f32 0.0, %v1048
        %v1050 = vpop.f32.mrb[0].mxu0
        %v1051 = vpop.f32.mrb[0].mxu0
        %v1052 = vadd.f32 0.0, %v1051
        %v1053 = vpop.f32.mrb[0].mxu0
        %1054 = vmatprep.mubr.bf16.mxu0 0
        %1055 = vmatmul.mubr.bf16.gmra.mrb[0].mxu0 %v405
        %v1056 = vpop.f32.mrb[0].mxu0
        %v1057 = vadd.f32 0.0, %v1056
        %v1058 = vpop.f32.mrb[0].mxu0
        %v1059 = vpop.f32.mrb[0].mxu0
        %v1060 = vadd.f32 0.0, %v1059
        %v1061 = vpop.f32.mrb[0].mxu0
        %1062 = vmatprep.mubr.bf16.mxu0 0
        %1063 = vmatmul.mubr.bf16.gmra.mrb[0].mxu0 %v406
        %v1064 = vpop.f32.mrb[0].mxu0
        %v1065 = vadd.f32 0.0, %v1064
        %v1066 = vpop.f32.mrb[0].mxu0
        %v1067 = vpop.f32.mrb[0].mxu0
        %v1068 = vadd.f32 0.0, %v1067
        %v1069 = vpop.f32.mrb[0].mxu0
        %1070 = vmatprep.mubr.bf16.mxu0 0
        %1071 = vmatmul.mubr.bf16.gmra.mrb[0].mxu0 %v868
        %v1072 = vpop.f32.mrb[0].mxu0
        %v1073 = vadd.f32 0.0, %v1072
        %v1074 = vpop.f32.mrb[0].mxu0
        %v1075 = vpop.f32.mrb[0].mxu0
        %v1076 = vadd.f32 0.0, %v1075
        %v1077 = vpop.f32.mrb[0].mxu0
        %1078 = vdwg.mxu0
        %v1079 = vadd.f32 %v721, %v953
        %v1080 = vadd.f32 %v724, %v956
        %v1081 = vadd.f32 %v729, %v961
        %v1082 = vadd.f32 %v732, %v964
        %v1083 = vadd.f32 %v737, %v969
        %v1084 = vadd.f32 %v740, %v972
        %v1085 = vadd.f32 %v745, %v977
        %v1086 = vadd.f32 %v748, %v980
        %v1087 = vadd.f32 %v753, %v985
        %v1088 = vadd.f32 %v756, %v988
        %v1089 = vadd.f32 %v761, %v993
        %v1090 = vadd.f32 %v764, %v996
        %v1091 = vadd.f32 %v769, %v1001
        %v1092 = vadd.f32 %v772, %v1004
        %v1093 = vadd.f32 %v777, %v1009
        %v1094 = vadd.f32 %v780, %v1012
        %v1095 = vadd.f32 %v785, %v1017
        %v1096 = vadd.f32 %v788, %v1020
        %v1097 = vadd.f32 %v793, %v1025
        %v1098 = vadd.f32 %v796, %v1028
        %v1099 = vadd.f32 %v801, %v1033
        %v1100 = vadd.f32 %v804, %v1036
        %v1101 = vadd.f32 %v809, %v1041
        %v1102 = vadd.f32 %v812, %v1044
        %v1103 = vadd.f32 %v817, %v1049
        %v1104 = vadd.f32 %v820, %v1052
        %v1105 = vadd.f32 %v825, %v1057
        %v1106 = vadd.f32 %v828, %v1060
        %v1107 = vadd.f32 %v833, %v1065
        %v1108 = vadd.f32 %v836, %v1068
        %v1109 = vadd.f32 %v841, %v1073
        %v1110 = vadd.f32 %v844, %v1076
        %s1111 = scalar_lea.vmem %s1, 192
        %v1112 = vld [vmem:[%s1111] sm:$0xf]
        %v1113 = vld [vmem:[%s1111 + $0x4] sm:$0xf]
        %v1114 = vld [vmem:[%s1111 + $0x8] sm:$0xf]
        %v1115 = vld [vmem:[%s1111 + $0xc] sm:$0xf]
        %v1116 = vld [vmem:[%s1111 + $0x10] sm:$0xf]
        %v1117 = vld [vmem:[%s1111 + $0x14] sm:$0xf]
        %v1118 = vld [vmem:[%s1111 + $0x18] sm:$0xf]
        %v1119 = vld [vmem:[%s1111 + $0x1c] sm:$0xf]
        %v1120 = vld [vmem:[%s1111 + $0x20] sm:$0xf]
        %v1121 = vld [vmem:[%s1111 + $0x24] sm:$0xf]
        %v1122 = vld [vmem:[%s1111 + $0x28] sm:$0xf]
        %v1123 = vld [vmem:[%s1111 + $0x2c] sm:$0xf]
        %v1124 = vld [vmem:[%s1111 + $0x30] sm:$0xf]
        %v1125 = vld [vmem:[%s1111 + $0x34] sm:$0xf]
        %v1126 = vld [vmem:[%s1111 + $0x38] sm:$0xf]
        %v1127 = vld [vmem:[%s1111 + $0x3c] sm:$0xf]
        %v1130 = vunpack.c.l.b16 %v290
        %v1131 = vunpack.c.l.b16 %v291
        %v1132 = vpack.c.b16 %v1131, %v1130
        %v1150 = vunpack.c.l.b16 %v1112
        %v1151 = vunpack.c.l.b16 %v1113
        %v1152 = vunpack.c.l.b16 %v1114
        %v1153 = vunpack.c.l.b16 %v1115
        %v1154 = vunpack.c.l.b16 %v1116
        %v1155 = vunpack.c.l.b16 %v1117
        %v1156 = vunpack.c.l.b16 %v1118
        %v1157 = vunpack.c.l.b16 %v1119
        %v1158 = vunpack.c.l.b16 %v1120
        %v1159 = vunpack.c.l.b16 %v1121
        %v1160 = vunpack.c.l.b16 %v1122
        %v1161 = vunpack.c.l.b16 %v1123
        %v1162 = vunpack.c.l.b16 %v1124
        %v1163 = vunpack.c.l.b16 %v1125
        %v1164 = vunpack.c.l.b16 %v1126
        %v1165 = vunpack.c.l.b16 %v1127
        %v1166 = vpack.c.b16 %v1151, %v1150
        %v1167 = vpack.c.b16 %v1153, %v1152
        %v1168 = vpack.c.b16 %v1155, %v1154
        %v1169 = vpack.c.b16 %v1157, %v1156
        %v1170 = vpack.c.b16 %v1159, %v1158
        %v1171 = vpack.c.b16 %v1161, %v1160
        %v1172 = vpack.c.b16 %v1163, %v1162
        %v1173 = vpack.c.b16 %v1165, %v1164
        %1182 = vmatprep.subr.bf16.mxu0 0
        %1183 = vmatpush1.bf16.msra.mxu0 %v1166
        %1184 = vmatprep.subr.bf16.mxu0 0
        %1185 = vmatpush1.bf16.msra.mxu0 %v1167
        %1186 = vmatprep.subr.bf16.mxu0 0
        %1187 = vmatpush1.bf16.msra.mxu0 %v1168
        %1188 = vmatprep.subr.bf16.mxu0 0
        %1189 = vmatpush1.bf16.msra.mxu0 %v1169
        %1190 = vmatprep.subr.bf16.mxu0 0
        %1191 = vmatpush1.bf16.msra.mxu0 %v1170
        %1192 = vmatprep.subr.bf16.mxu0 0
        %1193 = vmatpush1.bf16.msra.mxu0 %v1171
        %1194 = vmatprep.subr.bf16.mxu0 0
        %1195 = vmatpush1.bf16.msra.mxu0 %v1172
        %1196 = vmatprep.subr.bf16.mxu0 0
        %1197 = vmatpush1.bf16.msra.mxu0 %v1173
        %1198 = vmatprep.subr.bf16.mxu0 0
        %1199 = vmatpush1.bf16.msra.mxu0 0
        %1200 = vmatprep.subr.bf16.mxu0 0
        %1201 = vmatpush1.bf16.msra.mxu0 0
        %1202 = vmatprep.subr.bf16.mxu0 0
        %1203 = vmatpush1.bf16.msra.mxu0 0
        %1204 = vmatprep.subr.bf16.mxu0 0
        %1205 = vmatpush1.bf16.msra.mxu0 0
        %1206 = vmatprep.subr.bf16.mxu0 0
        %1207 = vmatpush1.bf16.msra.mxu0 0
        %1208 = vmatprep.subr.bf16.mxu0 0
        %1209 = vmatpush1.bf16.msra.mxu0 0
        %1210 = vmatprep.subr.bf16.mxu0 0
        %1211 = vmatpush1.bf16.msra.mxu0 0
        %1212 = vmatprep.subr.bf16.mxu0 0
        %1213 = vmatpush1.bf16.msra.mxu0 0
        %1214 = vmatprep.mubr.bf16.mxu0 0
        %1215 = vmatmul.mubr.bf16.gmra.mrb[0].mxu0 %v393
        %v1216 = vpop.f32.mrb[0].mxu0
        %v1217 = vadd.f32 0.0, %v1216
        %v1218 = vpop.f32.mrb[0].mxu0
        %v1219 = vpop.f32.mrb[0].mxu0
        %v1220 = vadd.f32 0.0, %v1219
        %v1221 = vpop.f32.mrb[0].mxu0
        %1222 = vmatprep.mubr.bf16.mxu0 0
        %1223 = vmatmul.mubr.bf16.gmra.mrb[0].mxu0 %v394
        %v1224 = vpop.f32.mrb[0].mxu0
        %v1225 = vadd.f32 0.0, %v1224
        %v1226 = vpop.f32.mrb[0].mxu0
        %v1227 = vpop.f32.mrb[0].mxu0
        %v1228 = vadd.f32 0.0, %v1227
        %v1229 = vpop.f32.mrb[0].mxu0
        %1230 = vmatprep.mubr.bf16.mxu0 0
        %1231 = vmatmul.mubr.bf16.gmra.mrb[0].mxu0 %v395
        %v1232 = vpop.f32.mrb[0].mxu0
        %v1233 = vadd.f32 0.0, %v1232
        %v1234 = vpop.f32.mrb[0].mxu0
        %v1235 = vpop.f32.mrb[0].mxu0
        %v1236 = vadd.f32 0.0, %v1235
        %v1237 = vpop.f32.mrb[0].mxu0
        %1238 = vmatprep.mubr.bf16.mxu0 0
        %1239 = vmatmul.mubr.bf16.gmra.mrb[0].mxu0 %v396
        %v1240 = vpop.f32.mrb[0].mxu0
        %v1241 = vadd.f32 0.0, %v1240
        %v1242 = vpop.f32.mrb[0].mxu0
        %v1243 = vpop.f32.mrb[0].mxu0
        %v1244 = vadd.f32 0.0, %v1243
        %v1245 = vpop.f32.mrb[0].mxu0
        %1246 = vmatprep.mubr.bf16.mxu0 0
        %1247 = vmatmul.mubr.bf16.gmra.mrb[0].mxu0 %v397
        %v1248 = vpop.f32.mrb[0].mxu0
        %v1249 = vadd.f32 0.0, %v1248
        %v1250 = vpop.f32.mrb[0].mxu0
        %v1251 = vpop.f32.mrb[0].mxu0
        %v1252 = vadd.f32 0.0, %v1251
        %v1253 = vpop.f32.mrb[0].mxu0
        %1254 = vmatprep.mubr.bf16.mxu0 0
        %1255 = vmatmul.mubr.bf16.gmra.mrb[0].mxu0 %v398
        %v1256 = vpop.f32.mrb[0].mxu0
        %v1257 = vadd.f32 0.0, %v1256
        %v1258 = vpop.f32.mrb[0].mxu0
        %v1259 = vpop.f32.mrb[0].mxu0
        %v1260 = vadd.f32 0.0, %v1259
        %v1261 = vpop.f32.mrb[0].mxu0
        %1262 = vmatprep.mubr.bf16.mxu0 0
        %1263 = vmatmul.mubr.bf16.gmra.mrb[0].mxu0 %v399
        %v1264 = vpop.f32.mrb[0].mxu0
        %v1265 = vadd.f32 0.0, %v1264
        %v1266 = vpop.f32.mrb[0].mxu0
        %v1267 = vpop.f32.mrb[0].mxu0
        %v1268 = vadd.f32 0.0, %v1267
        %v1269 = vpop.f32.mrb[0].mxu0
        %1270 = vmatprep.mubr.bf16.mxu0 0
        %1271 = vmatmul.mubr.bf16.gmra.mrb[0].mxu0 %v400
        %v1272 = vpop.f32.mrb[0].mxu0
        %v1273 = vadd.f32 0.0, %v1272
        %v1274 = vpop.f32.mrb[0].mxu0
        %v1275 = vpop.f32.mrb[0].mxu0
        %v1276 = vadd.f32 0.0, %v1275
        %v1277 = vpop.f32.mrb[0].mxu0
        %1278 = vmatprep.mubr.bf16.mxu0 0
        %1279 = vmatmul.mubr.bf16.gmra.mrb[0].mxu0 %v401
        %v1280 = vpop.f32.mrb[0].mxu0
        %v1281 = vadd.f32 0.0, %v1280
        %v1282 = vpop.f32.mrb[0].mxu0
        %v1283 = vpop.f32.mrb[0].mxu0
        %v1284 = vadd.f32 0.0, %v1283
        %v1285 = vpop.f32.mrb[0].mxu0
        %1286 = vmatprep.mubr.bf16.mxu0 0
        %1287 = vmatmul.mubr.bf16.gmra.mrb[0].mxu0 %v402
        %v1288 = vpop.f32.mrb[0].mxu0
        %v1289 = vadd.f32 0.0, %v1288
        %v1290 = vpop.f32.mrb[0].mxu0
        %v1291 = vpop.f32.mrb[0].mxu0
        %v1292 = vadd.f32 0.0, %v1291
        %v1293 = vpop.f32.mrb[0].mxu0
        %1294 = vmatprep.mubr.bf16.mxu0 0
        %1295 = vmatmul.mubr.bf16.gmra.mrb[0].mxu0 %v403
        %v1296 = vpop.f32.mrb[0].mxu0
        %v1297 = vadd.f32 0.0, %v1296
        %v1298 = vpop.f32.mrb[0].mxu0
        %v1299 = vpop.f32.mrb[0].mxu0
        %v1300 = vadd.f32 0.0, %v1299
        %v1301 = vpop.f32.mrb[0].mxu0
        %1302 = vmatprep.mubr.bf16.mxu0 0
        %1303 = vmatmul.mubr.bf16.gmra.mrb[0].mxu0 %v404
        %v1304 = vpop.f32.mrb[0].mxu0
        %v1305 = vadd.f32 0.0, %v1304
        %v1306 = vpop.f32.mrb[0].mxu0
        %v1307 = vpop.f32.mrb[0].mxu0
        %v1308 = vadd.f32 0.0, %v1307
        %v1309 = vpop.f32.mrb[0].mxu0
        %1310 = vmatprep.mubr.bf16.mxu0 0
        %1311 = vmatmul.mubr.bf16.gmra.mrb[0].mxu0 %v405
        %v1312 = vpop.f32.mrb[0].mxu0
        %v1313 = vadd.f32 0.0, %v1312
        %v1314 = vpop.f32.mrb[0].mxu0
        %v1315 = vpop.f32.mrb[0].mxu0
        %v1316 = vadd.f32 0.0, %v1315
        %v1317 = vpop.f32.mrb[0].mxu0
        %1318 = vmatprep.mubr.bf16.mxu0 0
        %1319 = vmatmul.mubr.bf16.gmra.mrb[0].mxu0 %v406
        %v1320 = vpop.f32.mrb[0].mxu0
        %v1321 = vadd.f32 0.0, %v1320
        %v1322 = vpop.f32.mrb[0].mxu0
        %v1323 = vpop.f32.mrb[0].mxu0
        %v1324 = vadd.f32 0.0, %v1323
        %v1325 = vpop.f32.mrb[0].mxu0
        %1326 = vmatprep.mubr.bf16.mxu0 0
        %1327 = vmatmul.mubr.bf16.gmra.mrb[0].mxu0 %v868
        %v1328 = vpop.f32.mrb[0].mxu0
        %v1329 = vadd.f32 0.0, %v1328
        %v1330 = vpop.f32.mrb[0].mxu0
        %v1331 = vpop.f32.mrb[0].mxu0
        %v1332 = vadd.f32 0.0, %v1331
        %v1333 = vpop.f32.mrb[0].mxu0
        %1334 = vmatprep.mubr.bf16.mxu0 0
        %1335 = vmatmul.mubr.bf16.gmra.mrb[0].mxu0 %v1132
        %v1336 = vpop.f32.mrb[0].mxu0
        %v1337 = vadd.f32 0.0, %v1336
        %v1338 = vpop.f32.mrb[0].mxu0
        %v1339 = vpop.f32.mrb[0].mxu0
        %v1340 = vadd.f32 0.0, %v1339
        %v1341 = vpop.f32.mrb[0].mxu0
        %1342 = vdwg.mxu0
        %v1343 = vadd.f32 %v1079, %v1217
        %v1344 = vadd.f32 %v1080, %v1220
        %v1345 = vadd.f32 %v1081, %v1225
        %v1346 = vadd.f32 %v1082, %v1228
        %v1347 = vadd.f32 %v1083, %v1233
        %v1348 = vadd.f32 %v1084, %v1236
        %v1349 = vadd.f32 %v1085, %v1241
        %v1350 = vadd.f32 %v1086, %v1244
        %v1351 = vadd.f32 %v1087, %v1249
        %v1352 = vadd.f32 %v1088, %v1252
        %v1353 = vadd.f32 %v1089, %v1257
        %v1354 = vadd.f32 %v1090, %v1260
        %v1355 = vadd.f32 %v1091, %v1265
        %v1356 = vadd.f32 %v1092, %v1268
        %v1357 = vadd.f32 %v1093, %v1273
        %v1358 = vadd.f32 %v1094, %v1276
        %v1359 = vadd.f32 %v1095, %v1281
        %v1360 = vadd.f32 %v1096, %v1284
        %v1361 = vadd.f32 %v1097, %v1289
        %v1362 = vadd.f32 %v1098, %v1292
        %v1363 = vadd.f32 %v1099, %v1297
        %v1364 = vadd.f32 %v1100, %v1300
        %v1365 = vadd.f32 %v1101, %v1305
        %v1366 = vadd.f32 %v1102, %v1308
        %v1367 = vadd.f32 %v1103, %v1313
        %v1368 = vadd.f32 %v1104, %v1316
        %v1369 = vadd.f32 %v1105, %v1321
        %v1370 = vadd.f32 %v1106, %v1324
        %v1371 = vadd.f32 %v1107, %v1329
        %v1372 = vadd.f32 %v1108, %v1332
        %v1373 = vadd.f32 %v1109, %v1337
        %v1374 = vadd.f32 %v1110, %v1340
        %s1375 = scalar_lea.vmem %s1, 256
        %v1376 = vld [vmem:[%s1375] sm:$0xf]
        %v1377 = vld [vmem:[%s1375 + $0x4] sm:$0xf]
        %v1378 = vld [vmem:[%s1375 + $0x8] sm:$0xf]
        %v1379 = vld [vmem:[%s1375 + $0xc] sm:$0xf]
        %v1380 = vld [vmem:[%s1375 + $0x10] sm:$0xf]
        %v1381 = vld [vmem:[%s1375 + $0x14] sm:$0xf]
        %v1382 = vld [vmem:[%s1375 + $0x18] sm:$0xf]
        %v1383 = vld [vmem:[%s1375 + $0x1c] sm:$0xf]
        %v1384 = vld [vmem:[%s1375 + $0x20] sm:$0xf]
        %v1385 = vld [vmem:[%s1375 + $0x24] sm:$0xf]
        %v1386 = vld [vmem:[%s1375 + $0x28] sm:$0xf]
        %v1387 = vld [vmem:[%s1375 + $0x2c] sm:$0xf]
        %v1388 = vld [vmem:[%s1375 + $0x30] sm:$0xf]
        %v1389 = vld [vmem:[%s1375 + $0x34] sm:$0xf]
        %v1390 = vld [vmem:[%s1375 + $0x38] sm:$0xf]
        %v1391 = vld [vmem:[%s1375 + $0x3c] sm:$0xf]
        %v1394 = vunpack.c.l.b16 %v292
        %v1395 = vunpack.c.l.b16 %v293
        %v1396 = vpack.c.b16 %v1395, %v1394
        %v1414 = vunpack.c.l.b16 %v1376
        %v1415 = vunpack.c.l.b16 %v1377
        %v1416 = vunpack.c.l.b16 %v1378
        %v1417 = vunpack.c.l.b16 %v1379
        %v1418 = vunpack.c.l.b16 %v1380
        %v1419 = vunpack.c.l.b16 %v1381
        %v1420 = vunpack.c.l.b16 %v1382
        %v1421 = vunpack.c.l.b16 %v1383
        %v1422 = vunpack.c.l.b16 %v1384
        %v1423 = vunpack.c.l.b16 %v1385
        %v1424 = vunpack.c.l.b16 %v1386
        %v1425 = vunpack.c.l.b16 %v1387
        %v1426 = vunpack.c.l.b16 %v1388
        %v1427 = vunpack.c.l.b16 %v1389
        %v1428 = vunpack.c.l.b16 %v1390
        %v1429 = vunpack.c.l.b16 %v1391
        %v1430 = vpack.c.b16 %v1415, %v1414
        %v1431 = vpack.c.b16 %v1417, %v1416
        %v1432 = vpack.c.b16 %v1419, %v1418
        %v1433 = vpack.c.b16 %v1421, %v1420
        %v1434 = vpack.c.b16 %v1423, %v1422
        %v1435 = vpack.c.b16 %v1425, %v1424
        %v1436 = vpack.c.b16 %v1427, %v1426
        %v1437 = vpack.c.b16 %v1429, %v1428
        %1446 = vmatprep.subr.bf16.mxu0 0
        %1447 = vmatpush1.bf16.msra.mxu0 %v1430
        %1448 = vmatprep.subr.bf16.mxu0 0
        %1449 = vmatpush1.bf16.msra.mxu0 %v1431
        %1450 = vmatprep.subr.bf16.mxu0 0
        %1451 = vmatpush1.bf16.msra.mxu0 %v1432
        %1452 = vmatprep.subr.bf16.mxu0 0
        %1453 = vmatpush1.bf16.msra.mxu0 %v1433
        %1454 = vmatprep.subr.bf16.mxu0 0
        %1455 = vmatpush1.bf16.msra.mxu0 %v1434
        %1456 = vmatprep.subr.bf16.mxu0 0
        %1457 = vmatpush1.bf16.msra.mxu0 %v1435
        %1458 = vmatprep.subr.bf16.mxu0 0
        %1459 = vmatpush1.bf16.msra.mxu0 %v1436
        %1460 = vmatprep.subr.bf16.mxu0 0
        %1461 = vmatpush1.bf16.msra.mxu0 %v1437
        %1462 = vmatprep.subr.bf16.mxu0 0
        %1463 = vmatpush1.bf16.msra.mxu0 0
        %1464 = vmatprep.subr.bf16.mxu0 0
        %1465 = vmatpush1.bf16.msra.mxu0 0
        %1466 = vmatprep.subr.bf16.mxu0 0
        %1467 = vmatpush1.bf16.msra.mxu0 0
        %1468 = vmatprep.subr.bf16.mxu0 0
        %1469 = vmatpush1.bf16.msra.mxu0 0
        %1470 = vmatprep.subr.bf16.mxu0 0
        %1471 = vmatpush1.bf16.msra.mxu0 0
        %1472 = vmatprep.subr.bf16.mxu0 0
        %1473 = vmatpush1.bf16.msra.mxu0 0
        %1474 = vmatprep.subr.bf16.mxu0 0
        %1475 = vmatpush1.bf16.msra.mxu0 0
        %1476 = vmatprep.subr.bf16.mxu0 0
        %1477 = vmatpush1.bf16.msra.mxu0 0
        %1478 = vmatprep.mubr.bf16.mxu0 0
        %1479 = vmatmul.mubr.bf16.gmra.mrb[0].mxu0 %v394
        %v1480 = vpop.f32.mrb[0].mxu0
        %v1481 = vadd.f32 0.0, %v1480
        %v1482 = vpop.f32.mrb[0].mxu0
        %v1483 = vpop.f32.mrb[0].mxu0
        %v1484 = vadd.f32 0.0, %v1483
        %v1485 = vpop.f32.mrb[0].mxu0
        %1486 = vmatprep.mubr.bf16.mxu0 0
        %1487 = vmatmul.mubr.bf16.gmra.mrb[0].mxu0 %v395
        %v1488 = vpop.f32.mrb[0].mxu0
        %v1489 = vadd.f32 0.0, %v1488
        %v1490 = vpop.f32.mrb[0].mxu0
        %v1491 = vpop.f32.mrb[0].mxu0
        %v1492 = vadd.f32 0.0, %v1491
        %v1493 = vpop.f32.mrb[0].mxu0
        %1494 = vmatprep.mubr.bf16.mxu0 0
        %1495 = vmatmul.mubr.bf16.gmra.mrb[0].mxu0 %v396
        %v1496 = vpop.f32.mrb[0].mxu0
        %v1497 = vadd.f32 0.0, %v1496
        %v1498 = vpop.f32.mrb[0].mxu0
        %v1499 = vpop.f32.mrb[0].mxu0
        %v1500 = vadd.f32 0.0, %v1499
        %v1501 = vpop.f32.mrb[0].mxu0
        %1502 = vmatprep.mubr.bf16.mxu0 0
        %1503 = vmatmul.mubr.bf16.gmra.mrb[0].mxu0 %v397
        %v1504 = vpop.f32.mrb[0].mxu0
        %v1505 = vadd.f32 0.0, %v1504
        %v1506 = vpop.f32.mrb[0].mxu0
        %v1507 = vpop.f32.mrb[0].mxu0
        %v1508 = vadd.f32 0.0, %v1507
        %v1509 = vpop.f32.mrb[0].mxu0
        %1510 = vmatprep.mubr.bf16.mxu0 0
        %1511 = vmatmul.mubr.bf16.gmra.mrb[0].mxu0 %v398
        %v1512 = vpop.f32.mrb[0].mxu0
        %v1513 = vadd.f32 0.0, %v1512
        %v1514 = vpop.f32.mrb[0].mxu0
        %v1515 = vpop.f32.mrb[0].mxu0
        %v1516 = vadd.f32 0.0, %v1515
        %v1517 = vpop.f32.mrb[0].mxu0
        %1518 = vmatprep.mubr.bf16.mxu0 0
        %1519 = vmatmul.mubr.bf16.gmra.mrb[0].mxu0 %v399
        %v1520 = vpop.f32.mrb[0].mxu0
        %v1521 = vadd.f32 0.0, %v1520
        %v1522 = vpop.f32.mrb[0].mxu0
        %v1523 = vpop.f32.mrb[0].mxu0
        %v1524 = vadd.f32 0.0, %v1523
        %v1525 = vpop.f32.mrb[0].mxu0
        %1526 = vmatprep.mubr.bf16.mxu0 0
        %1527 = vmatmul.mubr.bf16.gmra.mrb[0].mxu0 %v400
        %v1528 = vpop.f32.mrb[0].mxu0
        %v1529 = vadd.f32 0.0, %v1528
        %v1530 = vpop.f32.mrb[0].mxu0
        %v1531 = vpop.f32.mrb[0].mxu0
        %v1532 = vadd.f32 0.0, %v1531
        %v1533 = vpop.f32.mrb[0].mxu0
        %1534 = vmatprep.mubr.bf16.mxu0 0
        %1535 = vmatmul.mubr.bf16.gmra.mrb[0].mxu0 %v401
        %v1536 = vpop.f32.mrb[0].mxu0
        %v1537 = vadd.f32 0.0, %v1536
        %v1538 = vpop.f32.mrb[0].mxu0
        %v1539 = vpop.f32.mrb[0].mxu0
        %v1540 = vadd.f32 0.0, %v1539
        %v1541 = vpop.f32.mrb[0].mxu0
        %1542 = vmatprep.mubr.bf16.mxu0 0
        %1543 = vmatmul.mubr.bf16.gmra.mrb[0].mxu0 %v402
        %v1544 = vpop.f32.mrb[0].mxu0
        %v1545 = vadd.f32 0.0, %v1544
        %v1546 = vpop.f32.mrb[0].mxu0
        %v1547 = vpop.f32.mrb[0].mxu0
        %v1548 = vadd.f32 0.0, %v1547
        %v1549 = vpop.f32.mrb[0].mxu0
        %1550 = vmatprep.mubr.bf16.mxu0 0
        %1551 = vmatmul.mubr.bf16.gmra.mrb[0].mxu0 %v403
        %v1552 = vpop.f32.mrb[0].mxu0
        %v1553 = vadd.f32 0.0, %v1552
        %v1554 = vpop.f32.mrb[0].mxu0
        %v1555 = vpop.f32.mrb[0].mxu0
        %v1556 = vadd.f32 0.0, %v1555
        %v1557 = vpop.f32.mrb[0].mxu0
        %1558 = vmatprep.mubr.bf16.mxu0 0
        %1559 = vmatmul.mubr.bf16.gmra.mrb[0].mxu0 %v404
        %v1560 = vpop.f32.mrb[0].mxu0
        %v1561 = vadd.f32 0.0, %v1560
        %v1562 = vpop.f32.mrb[0].mxu0
        %v1563 = vpop.f32.mrb[0].mxu0
        %v1564 = vadd.f32 0.0, %v1563
        %v1565 = vpop.f32.mrb[0].mxu0
        %1566 = vmatprep.mubr.bf16.mxu0 0
        %1567 = vmatmul.mubr.bf16.gmra.mrb[0].mxu0 %v405
        %v1568 = vpop.f32.mrb[0].mxu0
        %v1569 = vadd.f32 0.0, %v1568
        %v1570 = vpop.f32.mrb[0].mxu0
        %v1571 = vpop.f32.mrb[0].mxu0
        %v1572 = vadd.f32 0.0, %v1571
        %v1573 = vpop.f32.mrb[0].mxu0
        %1574 = vmatprep.mubr.bf16.mxu0 0
        %1575 = vmatmul.mubr.bf16.gmra.mrb[0].mxu0 %v406
        %v1576 = vpop.f32.mrb[0].mxu0
        %v1577 = vadd.f32 0.0, %v1576
        %v1578 = vpop.f32.mrb[0].mxu0
        %v1579 = vpop.f32.mrb[0].mxu0
        %v1580 = vadd.f32 0.0, %v1579
        %v1581 = vpop.f32.mrb[0].mxu0
        %1582 = vmatprep.mubr.bf16.mxu0 0
        %1583 = vmatmul.mubr.bf16.gmra.mrb[0].mxu0 %v868
        %v1584 = vpop.f32.mrb[0].mxu0
        %v1585 = vadd.f32 0.0, %v1584
        %v1586 = vpop.f32.mrb[0].mxu0
        %v1587 = vpop.f32.mrb[0].mxu0
        %v1588 = vadd.f32 0.0, %v1587
        %v1589 = vpop.f32.mrb[0].mxu0
        %1590 = vmatprep.mubr.bf16.mxu0 0
        %1591 = vmatmul.mubr.bf16.gmra.mrb[0].mxu0 %v1132
        %v1592 = vpop.f32.mrb[0].mxu0
        %v1593 = vadd.f32 0.0, %v1592
        %v1594 = vpop.f32.mrb[0].mxu0
        %v1595 = vpop.f32.mrb[0].mxu0
        %v1596 = vadd.f32 0.0, %v1595
        %v1597 = vpop.f32.mrb[0].mxu0
        %1598 = vmatprep.mubr.bf16.mxu0 0
        %1599 = vmatmul.mubr.bf16.gmra.mrb[0].mxu0 %v1396
        %v1600 = vpop.f32.mrb[0].mxu0
        %v1601 = vadd.f32 0.0, %v1600
        %v1602 = vpop.f32.mrb[0].mxu0
        %v1603 = vpop.f32.mrb[0].mxu0
        %v1604 = vadd.f32 0.0, %v1603
        %v1605 = vpop.f32.mrb[0].mxu0
        %1606 = vdwg.mxu0
        %v1607 = vadd.f32 %v1343, %v1481
        %v1608 = vadd.f32 %v1344, %v1484
        %v1609 = vadd.f32 %v1345, %v1489
        %v1610 = vadd.f32 %v1346, %v1492
        %v1611 = vadd.f32 %v1347, %v1497
        %v1612 = vadd.f32 %v1348, %v1500
        %v1613 = vadd.f32 %v1349, %v1505
        %v1614 = vadd.f32 %v1350, %v1508
        %v1615 = vadd.f32 %v1351, %v1513
        %v1616 = vadd.f32 %v1352, %v1516
        %v1617 = vadd.f32 %v1353, %v1521
        %v1618 = vadd.f32 %v1354, %v1524
        %v1619 = vadd.f32 %v1355, %v1529
        %v1620 = vadd.f32 %v1356, %v1532
        %v1621 = vadd.f32 %v1357, %v1537
        %v1622 = vadd.f32 %v1358, %v1540
        %v1623 = vadd.f32 %v1359, %v1545
        %v1624 = vadd.f32 %v1360, %v1548
        %v1625 = vadd.f32 %v1361, %v1553
        %v1626 = vadd.f32 %v1362, %v1556
        %v1627 = vadd.f32 %v1363, %v1561
        %v1628 = vadd.f32 %v1364, %v1564
        %v1629 = vadd.f32 %v1365, %v1569
        %v1630 = vadd.f32 %v1366, %v1572
        %v1631 = vadd.f32 %v1367, %v1577
        %v1632 = vadd.f32 %v1368, %v1580
        %v1633 = vadd.f32 %v1369, %v1585
        %v1634 = vadd.f32 %v1370, %v1588
        %v1635 = vadd.f32 %v1371, %v1593
        %v1636 = vadd.f32 %v1372, %v1596
        %v1637 = vadd.f32 %v1373, %v1601
        %v1638 = vadd.f32 %v1374, %v1604
        %v1640 = vlaneseq
        %v1641 = vshrl.u32 %v1640, 7
        %v1642 = vsub.s32 0, %v1641
        %v1643 = vrot.slane %v243, %v1642
        %v1645 = vmul.f32 %v1607, %v1643
        %v1646 = vmul.f32 %v1608, %v1643
        %v1647 = vmul.f32 %v1609, %v1643
        %v1648 = vmul.f32 %v1610, %v1643
        %v1649 = vmul.f32 %v1611, %v1643
        %v1650 = vmul.f32 %v1612, %v1643
        %v1651 = vmul.f32 %v1613, %v1643
        %v1652 = vmul.f32 %v1614, %v1643
        %v1653 = vmul.f32 %v1615, %v1643
        %v1654 = vmul.f32 %v1616, %v1643
        %v1655 = vmul.f32 %v1617, %v1643
        %v1656 = vmul.f32 %v1618, %v1643
        %v1657 = vmul.f32 %v1619, %v1643
        %v1658 = vmul.f32 %v1620, %v1643
        %v1659 = vmul.f32 %v1621, %v1643
        %v1660 = vmul.f32 %v1622, %v1643
        %v1661 = vmul.f32 %v1623, %v1643
        %v1662 = vmul.f32 %v1624, %v1643
        %v1663 = vmul.f32 %v1625, %v1643
        %v1664 = vmul.f32 %v1626, %v1643
        %v1665 = vmul.f32 %v1627, %v1643
        %v1666 = vmul.f32 %v1628, %v1643
        %v1667 = vmul.f32 %v1629, %v1643
        %v1668 = vmul.f32 %v1630, %v1643
        %v1669 = vmul.f32 %v1631, %v1643
        %v1670 = vmul.f32 %v1632, %v1643
        %v1671 = vmul.f32 %v1633, %v1643
        %v1672 = vmul.f32 %v1634, %v1643
        %v1673 = vmul.f32 %v1635, %v1643
        %v1674 = vmul.f32 %v1636, %v1643
        %v1675 = vmul.f32 %v1637, %v1643
        %v1676 = vmul.f32 %v1638, %v1643
        %v1678 = vlaneseq
        %v1679 = vshrl.u32 %v1678, 7
        %v1680 = vsub.s32 0, %v1679
        %v1681 = vrot.slane %v244, %v1680
        %v1683 = vadd.f32 %v1645, %v1681
        %v1684 = vadd.f32 %v1646, %v1681
        %v1685 = vadd.f32 %v1647, %v1681
        %v1686 = vadd.f32 %v1648, %v1681
        %v1687 = vadd.f32 %v1649, %v1681
        %v1688 = vadd.f32 %v1650, %v1681
        %v1689 = vadd.f32 %v1651, %v1681
        %v1690 = vadd.f32 %v1652, %v1681
        %v1691 = vadd.f32 %v1653, %v1681
        %v1692 = vadd.f32 %v1654, %v1681
        %v1693 = vadd.f32 %v1655, %v1681
        %v1694 = vadd.f32 %v1656, %v1681
        %v1695 = vadd.f32 %v1657, %v1681
        %v1696 = vadd.f32 %v1658, %v1681
        %v1697 = vadd.f32 %v1659, %v1681
        %v1698 = vadd.f32 %v1660, %v1681
        %v1699 = vadd.f32 %v1661, %v1681
        %v1700 = vadd.f32 %v1662, %v1681
        %v1701 = vadd.f32 %v1663, %v1681
        %v1702 = vadd.f32 %v1664, %v1681
        %v1703 = vadd.f32 %v1665, %v1681
        %v1704 = vadd.f32 %v1666, %v1681
        %v1705 = vadd.f32 %v1667, %v1681
        %v1706 = vadd.f32 %v1668, %v1681
        %v1707 = vadd.f32 %v1669, %v1681
        %v1708 = vadd.f32 %v1670, %v1681
        %v1709 = vadd.f32 %v1671, %v1681
        %v1710 = vadd.f32 %v1672, %v1681
        %v1711 = vadd.f32 %v1673, %v1681
        %v1712 = vadd.f32 %v1674, %v1681
        %v1713 = vadd.f32 %v1675, %v1681
        %v1714 = vadd.f32 %v1676, %v1681
        %v1715 = vmin.f32 %v1683, 0.0
        %v1716 = vmin.f32 %v1684, 0.0
        %v1717 = vmin.f32 %v1685, 0.0
        %v1718 = vmin.f32 %v1686, 0.0
        %v1719 = vmin.f32 %v1687, 0.0
        %v1720 = vmin.f32 %v1688, 0.0
        %v1721 = vmin.f32 %v1689, 0.0
        %v1722 = vmin.f32 %v1690, 0.0
        %v1723 = vmin.f32 %v1691, 0.0
        %v1724 = vmin.f32 %v1692, 0.0
        %v1725 = vmin.f32 %v1693, 0.0
        %v1726 = vmin.f32 %v1694, 0.0
        %v1727 = vmin.f32 %v1695, 0.0
        %v1728 = vmin.f32 %v1696, 0.0
        %v1729 = vmin.f32 %v1697, 0.0
        %v1730 = vmin.f32 %v1698, 0.0
        %v1731 = vmin.f32 %v1699, 0.0
        %v1732 = vmin.f32 %v1700, 0.0
        %v1733 = vmin.f32 %v1701, 0.0
        %v1734 = vmin.f32 %v1702, 0.0
        %v1735 = vmin.f32 %v1703, 0.0
        %v1736 = vmin.f32 %v1704, 0.0
        %v1737 = vmin.f32 %v1705, 0.0
        %v1738 = vmin.f32 %v1706, 0.0
        %v1739 = vmin.f32 %v1707, 0.0
        %v1740 = vmin.f32 %v1708, 0.0
        %v1741 = vmin.f32 %v1709, 0.0
        %v1742 = vmin.f32 %v1710, 0.0
        %v1743 = vmin.f32 %v1711, 0.0
        %v1744 = vmin.f32 %v1712, 0.0
        %v1745 = vmin.f32 %v1713, 0.0
        %v1746 = vmin.f32 %v1714, 0.0
        %v1747 = vmul.f32 %v1715, 1.442695
        %v1748 = vpow.pop %v1747
        %v1749 = vmul.f32 %v1716, 1.442695
        %v1750 = vpow.pop %v1749
        %v1751 = vmul.f32 %v1717, 1.442695
        %v1752 = vpow.pop %v1751
        %v1753 = vmul.f32 %v1718, 1.442695
        %v1754 = vpow.pop %v1753
        %v1755 = vmul.f32 %v1719, 1.442695
        %v1756 = vpow.pop %v1755
        %v1757 = vmul.f32 %v1720, 1.442695
        %v1758 = vpow.pop %v1757
        %v1759 = vmul.f32 %v1721, 1.442695
        %v1760 = vpow.pop %v1759
        %v1761 = vmul.f32 %v1722, 1.442695
        %v1762 = vpow.pop %v1761
        %v1763 = vmul.f32 %v1723, 1.442695
        %v1764 = vpow.pop %v1763
        %v1765 = vmul.f32 %v1724, 1.442695
        %v1766 = vpow.pop %v1765
        %v1767 = vmul.f32 %v1725, 1.442695
        %v1768 = vpow.pop %v1767
        %v1769 = vmul.f32 %v1726, 1.442695
        %v1770 = vpow.pop %v1769
        %v1771 = vmul.f32 %v1727, 1.442695
        %v1772 = vpow.pop %v1771
        %v1773 = vmul.f32 %v1728, 1.442695
        %v1774 = vpow.pop %v1773
        %v1775 = vmul.f32 %v1729, 1.442695
        %v1776 = vpow.pop %v1775
        %v1777 = vmul.f32 %v1730, 1.442695
        %v1778 = vpow.pop %v1777
        %v1779 = vmul.f32 %v1731, 1.442695
        %v1780 = vpow.pop %v1779
        %v1781 = vmul.f32 %v1732, 1.442695
        %v1782 = vpow.pop %v1781
        %v1783 = vmul.f32 %v1733, 1.442695
        %v1784 = vpow.pop %v1783
        %v1785 = vmul.f32 %v1734, 1.442695
        %v1786 = vpow.pop %v1785
        %v1787 = vmul.f32 %v1735, 1.442695
        %v1788 = vpow.pop %v1787
        %v1789 = vmul.f32 %v1736, 1.442695
        %v1790 = vpow.pop %v1789
        %v1791 = vmul.f32 %v1737, 1.442695
        %v1792 = vpow.pop %v1791
        %v1793 = vmul.f32 %v1738, 1.442695
        %v1794 = vpow.pop %v1793
        %v1795 = vmul.f32 %v1739, 1.442695
        %v1796 = vpow.pop %v1795
        %v1797 = vmul.f32 %v1740, 1.442695
        %v1798 = vpow.pop %v1797
        %v1799 = vmul.f32 %v1741, 1.442695
        %v1800 = vpow.pop %v1799
        %v1801 = vmul.f32 %v1742, 1.442695
        %v1802 = vpow.pop %v1801
        %v1803 = vmul.f32 %v1743, 1.442695
        %v1804 = vpow.pop %v1803
        %v1805 = vmul.f32 %v1744, 1.442695
        %v1806 = vpow.pop %v1805
        %v1807 = vmul.f32 %v1745, 1.442695
        %v1808 = vpow.pop %v1807
        %v1809 = vmul.f32 %v1746, 1.442695
        %v1810 = vpow.pop %v1809
        %v1811 = vsub.f32 %v1748, 1.0
        %v1812 = vsub.f32 %v1750, 1.0
        %v1813 = vsub.f32 %v1752, 1.0
        %v1814 = vsub.f32 %v1754, 1.0
        %v1815 = vsub.f32 %v1756, 1.0
        %v1816 = vsub.f32 %v1758, 1.0
        %v1817 = vsub.f32 %v1760, 1.0
        %v1818 = vsub.f32 %v1762, 1.0
        %v1819 = vsub.f32 %v1764, 1.0
        %v1820 = vsub.f32 %v1766, 1.0
        %v1821 = vsub.f32 %v1768, 1.0
        %v1822 = vsub.f32 %v1770, 1.0
        %v1823 = vsub.f32 %v1772, 1.0
        %v1824 = vsub.f32 %v1774, 1.0
        %v1825 = vsub.f32 %v1776, 1.0
        %v1826 = vsub.f32 %v1778, 1.0
        %v1827 = vsub.f32 %v1780, 1.0
        %v1828 = vsub.f32 %v1782, 1.0
        %v1829 = vsub.f32 %v1784, 1.0
        %v1830 = vsub.f32 %v1786, 1.0
        %v1831 = vsub.f32 %v1788, 1.0
        %v1832 = vsub.f32 %v1790, 1.0
        %v1833 = vsub.f32 %v1792, 1.0
        %v1834 = vsub.f32 %v1794, 1.0
        %v1835 = vsub.f32 %v1796, 1.0
        %v1836 = vsub.f32 %v1798, 1.0
        %v1837 = vsub.f32 %v1800, 1.0
        %v1838 = vsub.f32 %v1802, 1.0
        %v1839 = vsub.f32 %v1804, 1.0
        %v1840 = vsub.f32 %v1806, 1.0
        %v1841 = vsub.f32 %v1808, 1.0
        %v1842 = vsub.f32 %v1810, 1.0
        %vm1843 = vcmp.gt.f32.partialorder %v1683, 0.0
        %vm1844 = vcmp.gt.f32.partialorder %v1684, 0.0
        %vm1845 = vcmp.gt.f32.partialorder %v1685, 0.0
        %vm1846 = vcmp.gt.f32.partialorder %v1686, 0.0
        %vm1847 = vcmp.gt.f32.partialorder %v1687, 0.0
        %vm1848 = vcmp.gt.f32.partialorder %v1688, 0.0
        %vm1849 = vcmp.gt.f32.partialorder %v1689, 0.0
        %vm1850 = vcmp.gt.f32.partialorder %v1690, 0.0
        %vm1851 = vcmp.gt.f32.partialorder %v1691, 0.0
        %vm1852 = vcmp.gt.f32.partialorder %v1692, 0.0
        %vm1853 = vcmp.gt.f32.partialorder %v1693, 0.0
        %vm1854 = vcmp.gt.f32.partialorder %v1694, 0.0
        %vm1855 = vcmp.gt.f32.partialorder %v1695, 0.0
        %vm1856 = vcmp.gt.f32.partialorder %v1696, 0.0
        %vm1857 = vcmp.gt.f32.partialorder %v1697, 0.0
        %vm1858 = vcmp.gt.f32.partialorder %v1698, 0.0
        %vm1859 = vcmp.gt.f32.partialorder %v1699, 0.0
        %vm1860 = vcmp.gt.f32.partialorder %v1700, 0.0
        %vm1861 = vcmp.gt.f32.partialorder %v1701, 0.0
        %vm1862 = vcmp.gt.f32.partialorder %v1702, 0.0
        %vm1863 = vcmp.gt.f32.partialorder %v1703, 0.0
        %vm1864 = vcmp.gt.f32.partialorder %v1704, 0.0
        %vm1865 = vcmp.gt.f32.partialorder %v1705, 0.0
        %vm1866 = vcmp.gt.f32.partialorder %v1706, 0.0
        %vm1867 = vcmp.gt.f32.partialorder %v1707, 0.0
        %vm1868 = vcmp.gt.f32.partialorder %v1708, 0.0
        %vm1869 = vcmp.gt.f32.partialorder %v1709, 0.0
        %vm1870 = vcmp.gt.f32.partialorder %v1710, 0.0
        %vm1871 = vcmp.gt.f32.partialorder %v1711, 0.0
        %vm1872 = vcmp.gt.f32.partialorder %v1712, 0.0
        %vm1873 = vcmp.gt.f32.partialorder %v1713, 0.0
        %vm1874 = vcmp.gt.f32.partialorder %v1714, 0.0
        %v1875 = vsel %vm1843, %v1683, %v1811
        %v1876 = vsel %vm1844, %v1684, %v1812
        %v1877 = vsel %vm1845, %v1685, %v1813
        %v1878 = vsel %vm1846, %v1686, %v1814
        %v1879 = vsel %vm1847, %v1687, %v1815
        %v1880 = vsel %vm1848, %v1688, %v1816
        %v1881 = vsel %vm1849, %v1689, %v1817
        %v1882 = vsel %vm1850, %v1690, %v1818
        %v1883 = vsel %vm1851, %v1691, %v1819
        %v1884 = vsel %vm1852, %v1692, %v1820
        %v1885 = vsel %vm1853, %v1693, %v1821
        %v1886 = vsel %vm1854, %v1694, %v1822
        %v1887 = vsel %vm1855, %v1695, %v1823
        %v1888 = vsel %vm1856, %v1696, %v1824
        %v1889 = vsel %vm1857, %v1697, %v1825
        %v1890 = vsel %vm1858, %v1698, %v1826
        %v1891 = vsel %vm1859, %v1699, %v1827
        %v1892 = vsel %vm1860, %v1700, %v1828
        %v1893 = vsel %vm1861, %v1701, %v1829
        %v1894 = vsel %vm1862, %v1702, %v1830
        %v1895 = vsel %vm1863, %v1703, %v1831
        %v1896 = vsel %vm1864, %v1704, %v1832
        %v1897 = vsel %vm1865, %v1705, %v1833
        %v1898 = vsel %vm1866, %v1706, %v1834
        %v1899 = vsel %vm1867, %v1707, %v1835
        %v1900 = vsel %vm1868, %v1708, %v1836
        %v1901 = vsel %vm1869, %v1709, %v1837
        %v1902 = vsel %vm1870, %v1710, %v1838
        %v1903 = vsel %vm1871, %v1711, %v1839
        %v1904 = vsel %vm1872, %v1712, %v1840
        %v1905 = vsel %vm1873, %v1713, %v1841
        %v1906 = vsel %vm1874, %v1714, %v1842
        %s1907 = smul.u32 %s246, 256
        %s1908 = scalar_lea.vmem %s240, %s1907
        %1909 = vst [vmem:[%s1908] sm:$0xff] %v1875
        %1910 = vst [vmem:[%s1908 + $0x8] sm:$0xff] %v1876
        %1911 = vst [vmem:[%s1908 + $0x10] sm:$0xff] %v1877
        %1912 = vst [vmem:[%s1908 + $0x18] sm:$0xff] %v1878
        %1913 = vst [vmem:[%s1908 + $0x20] sm:$0xff] %v1879
        %1914 = vst [vmem:[%s1908 + $0x28] sm:$0xff] %v1880
        %1915 = vst [vmem:[%s1908 + $0x30] sm:$0xff] %v1881
        %1916 = vst [vmem:[%s1908 + $0x38] sm:$0xff] %v1882
        %1917 = vst [vmem:[%s1908 + $0x40] sm:$0xff] %v1883
        %1918 = vst [vmem:[%s1908 + $0x48] sm:$0xff] %v1884
        %1919 = vst [vmem:[%s1908 + $0x50] sm:$0xff] %v1885
        %1920 = vst [vmem:[%s1908 + $0x58] sm:$0xff] %v1886
        %1921 = vst [vmem:[%s1908 + $0x60] sm:$0xff] %v1887
        %1922 = vst [vmem:[%s1908 + $0x68] sm:$0xff] %v1888
        %1923 = vst [vmem:[%s1908 + $0x70] sm:$0xff] %v1889
        %1924 = vst [vmem:[%s1908 + $0x78] sm:$0xff] %v1890
        %1925 = vst [vmem:[%s1908 + $0x80] sm:$0xff] %v1891
        %1926 = vst [vmem:[%s1908 + $0x88] sm:$0xff] %v1892
        %1927 = vst [vmem:[%s1908 + $0x90] sm:$0xff] %v1893
        %1928 = vst [vmem:[%s1908 + $0x98] sm:$0xff] %v1894
        %1929 = vst [vmem:[%s1908 + $0xa0] sm:$0xff] %v1895
        %1930 = vst [vmem:[%s1908 + $0xa8] sm:$0xff] %v1896
        %1931 = vst [vmem:[%s1908 + $0xb0] sm:$0xff] %v1897
        %1932 = vst [vmem:[%s1908 + $0xb8] sm:$0xff] %v1898
        %1933 = vst [vmem:[%s1908 + $0xc0] sm:$0xff] %v1899
        %1934 = vst [vmem:[%s1908 + $0xc8] sm:$0xff] %v1900
        %1935 = vst [vmem:[%s1908 + $0xd0] sm:$0xff] %v1901
        %1936 = vst [vmem:[%s1908 + $0xd8] sm:$0xff] %v1902
        %1937 = vst [vmem:[%s1908 + $0xe0] sm:$0xff] %v1903
        %1938 = vst [vmem:[%s1908 + $0xe8] sm:$0xff] %v1904
        %1939 = vst [vmem:[%s1908 + $0xf0] sm:$0xff] %v1905
        %1940 = vst [vmem:[%s1908 + $0xf8] sm:$0xff] %v1906
      $region41: #{luconv_forward.1} parent=35 // loop_footer
        %s250 = sadd.s32 1, %s246
      $region42: #{luconv_forward.1} parent=35 // loop_footer_branch
        %245 = sbr.rel target = $region38
      $region43: #{luconv_forward.1} parent=35 // loop_exit
        _
      %s1941 = smul.u32 8, %s20
      %p1942 = scmp.lt.s32.totalorder %s19, 1
      %s1943 = scalar_select %p1942, %s19, 1
      %p1944 = scmp.lt.s32.totalorder %s1941, 15
      %s1945 = scalar_select %p1944, %s1941, 15
      %s1946 = smul.addr %s1945, 32
      %s1947 = smul.addr %s1943, 512
      %s1948 = sadd.s32 %s1946, %s1947
      %s1949 = smul.addr %s1948, 8
      %s1950 = scalar_lea.vmem %s4, %s1949
      // Predicated region
      $region44: #{luconv_forward.1} parent=35 // pred_check
        %p1951 = pneg %p138
      $region45: #{luconv_forward.1} parent=35 // pred_check_branch
        %1953 = sbr.rel (%p1951) target = $region47
      $region46: #{luconv_forward.1} parent=35 // pred_region
        %s1954 = smul.u32 8, %s20
      $region47: #{luconv_forward.1} parent=35 // pred_fallthru
        _
    $region36: #{luconv_forward.1} parent=5 // pred_fallthru
      _
    %p1955 = scmp.le.s32.totalorder 2, %s10
    // Predicated region
    $region48: #{luconv_forward.1} parent=5 // pred_check
      %p1956 = pneg %p1955
    $region49: #{luconv_forward.1} parent=5 // pred_check_branch
      %1958 = sbr.rel (%p1956) target = $region51
    $region50: #{luconv_forward.1} parent=5 // pred_region
      %s1959 = ssub.s32 %s10, 2
      // Predicated region
      $region52: #{luconv_forward.1} parent=50 // pred_check
        %p1960 = pneg %p144
      $region53: #{luconv_forward.1} parent=50 // pred_check_branch
        %1962 = sbr.rel (%p1960) target = $region55
      $region54: #{luconv_forward.1} parent=50 // pred_region
        %s1963 = smul.u32 8, %s22
        %p1964 = scmp.lt.s32.totalorder %s21, 1
        %s1965 = scalar_select %p1964, %s21, 1
        %p1966 = scmp.lt.s32.totalorder %s1963, 15
        %s1967 = scalar_select %p1966, %s1963, 15
        %s1968 = smul.addr %s1967, 32
        %s1969 = smul.addr %s1965, 512
        %s1970 = sadd.s32 %s1968, %s1969
        %s1971 = smul.addr %s1970, 8
        %s1972 = scalar_lea.vmem %s4, %s1971
      $region55: #{luconv_forward.1} parent=50 // pred_fallthru
        _
    $region51: #{luconv_forward.1} parent=5 // pred_fallthru
      _
  $region6: #{luconv_forward.1} parent=0 // loop_footer
    %s14 = sadd.s32 1, %s10
  $region7: #{luconv_forward.1} parent=0 // loop_footer_branch
    %9 = sbr.rel target = $region3
  $region8: #{luconv_forward.1} parent=0 // loop_exit
    _

</llo_original>
